<compile_context>
chip_gen: v7x
topology: tpu7x:2x2x1
jax: 0.10.0
libtpu: 0.0.40
codegen_flags: <defaults>
</compile_context>

<pallas_src>
import jax
import jax.numpy as jnp
from jax.experimental import pallas as pl
from jax.experimental.pallas import tpu as pltpu

LN_EPS = 1e-5   # PyTorch nn.LayerNorm default
LANE = 128      # TPU lane width
SUBLANE = 8


def _round_up(n, m):
    return ((n + m - 1) // m) * m


def _pad_to(a, shape):
    return jnp.pad(a, [(0, s - d) for d, s in zip(a.shape, shape)])


# ----------------------------------------------------------------------------
# Kernel
# ----------------------------------------------------------------------------
def _make_kernel(d_model, num_layers):
    """Kernel for grid = (batch_tiles, num_layers)."""
    inv_d = 1.0 / d_model

    def layernorm(x, g, b, mask):
        # Padded lanes of x are exactly zero, so sum * (1/d_model) is the
        # true mean; the mask removes the (-mu) contribution of padded lanes
        # from the variance.  Matches PyTorch's biased-variance LayerNorm.
        mu = jnp.sum(x, axis=-1, keepdims=True) * inv_d
        diff = (x - mu) * mask
        var = jnp.sum(diff * diff, axis=-1, keepdims=True) * inv_d
        return diff * jax.lax.rsqrt(var + LN_EPS) * g + b

    def kernel(x_ref, emb_w_ref, emb_b_ref,
               wvo_ref, bvo_ref,
               w1_ref, b1_ref, w2_ref, b2_ref,
               ln1_g_ref, ln1_b_ref, ln2_g_ref, ln2_b_ref,
               fc_w_ref, fc_b_ref,
               out_ref, h_ref):
        layer = pl.program_id(1)
        d_pad = h_ref.shape[-1]
        if d_pad == d_model:
            mask = 1.0
        else:
            lane = jax.lax.broadcasted_iota(jnp.int32, (1, d_pad), 1)
            mask = (lane < d_model).astype(jnp.float32)

        # Layer step 0: embedding linear; h stays resident in VMEM scratch
        # across the "arbitrary" layer axis.
        @pl.when(layer == 0)
        def _():
            xw = x_ref[...].astype(emb_w_ref.dtype)
            h_ref[...] = (jnp.dot(xw, emb_w_ref[...],
                                  preferred_element_type=jnp.float32)
                          + emb_b_ref[...])

        h = h_ref[...]
        cdt = wvo_ref.dtype      # matmul compute dtype (f32 or bf16)

        # Self-attention (seq_len == 1 -> softmax == 1 -> out_proj(V(x)));
        # Wv@Wo / bv@Wo+bo were fused offline: a single DxD matmul.
        sa = jnp.dot(h.astype(cdt), wvo_ref[...],
                     preferred_element_type=jnp.float32) + bvo_ref[...]
        h = layernorm(h + sa, ln1_g_ref[...], ln1_b_ref[...], mask)

        # Feed-forward: linear1 -> relu -> linear2 (post-norm).
        ff = jnp.maximum(
            jnp.dot(h.astype(cdt), w1_ref[...],
                    preferred_element_type=jnp.float32) + b1_ref[...], 0.0)
        ff = jnp.dot(ff.astype(cdt), w2_ref[...],
                     preferred_element_type=jnp.float32) + b2_ref[...]
        h = layernorm(h + ff, ln2_g_ref[...], ln2_b_ref[...], mask)
        h_ref[...] = h

        # Classifier head on the last layer step; output lanes are padded to
        # a multiple of 128 so the store is lane-dense (no masked vst).
        @pl.when(layer == num_layers - 1)
        def _():
            out = jnp.dot(h.astype(fc_w_ref.dtype), fc_w_ref[...],
                          preferred_element_type=jnp.float32) + fc_b_ref[...]
            out_ref[...] = out.astype(out_ref.dtype)

    return kernel


# ----------------------------------------------------------------------------
# Offline parameter preparation: attention fusion + lane padding + dtype cast
# ----------------------------------------------------------------------------
def prepare_params(params, compute_dtype=jnp.float32):
    """Fuse (Wv, Wo) in float32 and zero-pad all lane dims to multiples of 128.

    Weights are cast to `compute_dtype` (bf16 feeds the MXU bf16 path on
    v6e/v7x); biases / LayerNorm params stay f32 (VPU math stays f32).
    """
    in_dim, d_model = params["emb_w"].shape
    d_ff = params["w1"].shape[2]
    n_cls = params["fc_w"].shape[1]
    n_layers = params["wv"].shape[0]

    ip = _round_up(in_dim, LANE)
    dp = _round_up(d_model, LANE)
    fp = _round_up(d_ff, LANE)
    cp = _round_up(n_cls, LANE)

    # seq_len == 1: attention == out_proj(V(x)) == x @ (Wv@Wo) + (bv@Wo + bo)
    wvo = jnp.einsum("lij,ljk->lik", params["wv"], params["wo"])      # f32
    bvo = jnp.einsum("lij,ljk->lik", params["bv"], params["wo"]) + params["bo"]

    prep = {
        "emb_w": _pad_to(params["emb_w"], (ip, dp)).astype(compute_dtype),
        "emb_b": _pad_to(params["emb_b"], (1, dp)),
        "wvo":   _pad_to(wvo, (n_layers, dp, dp)).astype(compute_dtype),
        "bvo":   _pad_to(bvo, (n_layers, 1, dp)),
        "w1":    _pad_to(params["w1"], (n_layers, dp, fp)).astype(compute_dtype),
        "b1":    _pad_to(params["b1"], (n_layers, 1, fp)),
        "w2":    _pad_to(params["w2"], (n_layers, fp, dp)).astype(compute_dtype),
        "b2":    _pad_to(params["b2"], (n_layers, 1, dp)),
        "ln1_g": _pad_to(params["ln1_g"], (n_layers, 1, dp)),
        "ln1_b": _pad_to(params["ln1_b"], (n_layers, 1, dp)),
        "ln2_g": _pad_to(params["ln2_g"], (n_layers, 1, dp)),
        "ln2_b": _pad_to(params["ln2_b"], (n_layers, 1, dp)),
        "fc_w":  _pad_to(params["fc_w"], (dp, cp)).astype(compute_dtype),
        "fc_b":  _pad_to(params["fc_b"], (1, cp)),
    }
    meta = dict(in_dim=in_dim, d_model=d_model, d_ff=d_ff, n_cls=n_cls,
                n_layers=n_layers, ip=ip, dp=dp, fp=fp, cp=cp)
    return prep, meta


# ----------------------------------------------------------------------------
# Pallas wrapper
# ----------------------------------------------------------------------------
def transformer_forward(x, prep, meta, *, tb=None):
    B, in_dim = x.shape
    assert in_dim == meta["in_dim"], (in_dim, meta["in_dim"])
    ip, dp, fp, cp = meta["ip"], meta["dp"], meta["fp"], meta["cp"]
    L, C = meta["n_layers"], meta["n_cls"]

    # Batch tile: >=128 rows fill the MXU; 8 rows is the sublane minimum.
    # (On v7x pick tb <= B/2 once B >= 256 so both TensorCores get a
    #  'parallel' grid step.)
    if tb is None:
        tb = min(B, 128)
    assert B % tb == 0 and tb % SUBLANE == 0, (B, tb)

    xp = _pad_to(x, (B, ip))

    def invariant(shape):               # DMA'd once, resident across the grid
        nd = len(shape)
        return pl.BlockSpec(shape, lambda i, l, nd=nd: (0,) * nd)

    def per_layer(shape):               # one layer's weights streamed per step
        return pl.BlockSpec((None,) + shape[1:], lambda i, l: (l, 0, 0))

    in_specs = [
        pl.BlockSpec((tb, ip), lambda i, l: (i, 0)),                 # x
        invariant((ip, dp)), invariant((1, dp)),                     # embedding
        per_layer(prep["wvo"].shape), per_layer(prep["bvo"].shape),  # attn
        per_layer(prep["w1"].shape), per_layer(prep["b1"].shape),    # ffn 1
        per_layer(prep["w2"].shape), per_layer(prep["b2"].shape),    # ffn 2
        per_layer(prep["ln1_g"].shape), per_layer(prep["ln1_b"].shape),
        per_layer(prep["ln2_g"].shape), per_layer(prep["ln2_b"].shape),
        invariant((dp, cp)), invariant((1, cp)),                     # head
    ]

    out_padded = pl.pallas_call(
        _make_kernel(meta["d_model"], L),
        out_shape=jax.ShapeDtypeStruct((B, cp), x.dtype),
        grid_spec=pltpu.PrefetchScalarGridSpec(
            num_scalar_prefetch=0,
            grid=(B // tb, L),
            in_specs=in_specs,
            out_specs=pl.BlockSpec((tb, cp), lambda i, l: (i, 0)),
            scratch_shapes=[pltpu.VMEM((tb, dp), jnp.float32)],      # resident h
        ),
        compiler_params=pltpu.CompilerParams(
            dimension_semantics=("parallel", "arbitrary")),
    )(xp,
      prep["emb_w"], prep["emb_b"],
      prep["wvo"], prep["bvo"],
      prep["w1"], prep["b1"], prep["w2"], prep["b2"],
      prep["ln1_g"], prep["ln1_b"], prep["ln2_g"], prep["ln2_b"],
      prep["fc_w"], prep["fc_b"])

    return out_padded[:, :C]


# ----------------------------------------------------------------------------
# Pure-JAX reference (unfused, unpadded) with identical semantics
# ----------------------------------------------------------------------------
def reference(x, params):
    def ln(x, g, b):
        mu = jnp.mean(x, axis=-1, keepdims=True)
        var = jnp.mean((x - mu) ** 2, axis=-1, keepdims=True)
        return (x - mu) * jax.lax.rsqrt(var + LN_EPS) * g + b

    h = x @ params["emb_w"] + params["emb_b"]
    for l in range(params["wv"].shape[0]):
        v = h @ params["wv"][l] + params["bv"][l]
        sa = v @ params["wo"][l] + params["bo"][l]
        h = ln(h + sa, params["ln1_g"][l], params["ln1_b"][l])
        ff = jnp.maximum(h @ params["w1"][l] + params["b1"][l], 0.0)
        ff = ff @ params["w2"][l] + params["b2"][l]
        h = ln(h + ff, params["ln2_g"][l], params["ln2_b"][l])
    return h @ params["fc_w"] + params["fc_b"]


if __name__ == "__main__":
    # Shapes consistent with the module's forward:
    # input_dim=32, d_model = dim_feedforward = 64, num_heads=4 (inert at
    # seq_len=1), num_layers=2, num_classes=8, batch=8.
    B, INPUT_DIM, D, C, L = 8, 32, 64, 8, 2

    key = jax.random.PRNGKey(0)
    keys = jax.random.split(key, 13)

    def w(k, shape, scale=0.05):
        return jax.random.normal(k, shape, jnp.float32) * scale

    params = {
        "emb_w": w(keys[0], (INPUT_DIM, D)),
        "emb_b": w(keys[1], (1, D)),
        # stacked per-layer params (leading axis = layer index)
        "wv": w(keys[2], (L, D, D)),
        "bv": w(keys[3], (L, 1, D)),
        "wo": w(keys[4], (L, D, D)),
        "bo": w(keys[5], (L, 1, D)),
        "w1": w(keys[6], (L, D, D)),
        "b1": w(keys[7], (L, 1, D)),
        "w2": w(keys[8], (L, D, D)),
        "b2": w(keys[9], (L, 1, D)),
        "ln1_g": jnp.ones((L, 1, D), jnp.float32),
        "ln1_b": jnp.zeros((L, 1, D), jnp.float32),
        "ln2_g": jnp.ones((L, 1, D), jnp.float32),
        "ln2_b": jnp.zeros((L, 1, D), jnp.float32),
        "fc_w": w(keys[10], (D, C)),
        "fc_b": w(keys[11], (1, C)),
    }
    # NOTE: W_q / W_k of nn.MultiheadAttention are omitted: with seq_len == 1
    # the softmax weight is exactly 1 and they cannot affect the output.
    # Dropout is identity (eval semantics).

    x = jax.random.normal(keys[12], (B, INPUT_DIM), jnp.float32)
    ref = reference(x, params)

    # ---- f32 path (exact PyTorch-f32 semantics) -----------------------------
    prep32, meta32 = prepare_params(params, compute_dtype=jnp.float32)
    out = jax.block_until_ready(transformer_forward(x, prep32, meta32))
    assert out.shape == (B, C), out.shape
    assert jnp.allclose(out, ref, atol=1e-5, rtol=1e-5), \
        float(jnp.max(jnp.abs(out - ref)))

    # ---- bf16-matmul path (v6e/v7x MXU optimization; f32 VPU math) ----------
    prep16, meta16 = prepare_params(params, compute_dtype=jnp.bfloat16)
    out16 = jax.block_until_ready(transformer_forward(x, prep16, meta16))
    assert out16.shape == (B, C), out16.shape
    assert jnp.allclose(out16, ref, atol=1e-1, rtol=1e-1), \
        float(jnp.max(jnp.abs(out16 - ref)))

    print("KERNEL_OK")
</pallas_src>

<mosaic_0001>
module attributes {stable_mosaic.version = 11 : i64} {
  func.func @kernel(%arg0: i32, %arg1: i32, %arg2: memref<8x128xf32, #tpu.memory_space<vmem>>, %arg3: memref<128x128xf32, #tpu.memory_space<vmem>>, %arg4: memref<1x128xf32, #tpu.memory_space<vmem>>, %arg5: memref<1x128x128xf32, #tpu.memory_space<vmem>>, %arg6: memref<1x1x128xf32, #tpu.memory_space<vmem>>, %arg7: memref<1x128x128xf32, #tpu.memory_space<vmem>>, %arg8: memref<1x1x128xf32, #tpu.memory_space<vmem>>, %arg9: memref<1x128x128xf32, #tpu.memory_space<vmem>>, %arg10: memref<1x1x128xf32, #tpu.memory_space<vmem>>, %arg11: memref<1x1x128xf32, #tpu.memory_space<vmem>>, %arg12: memref<1x1x128xf32, #tpu.memory_space<vmem>>, %arg13: memref<1x1x128xf32, #tpu.memory_space<vmem>>, %arg14: memref<1x1x128xf32, #tpu.memory_space<vmem>>, %arg15: memref<128x128xf32, #tpu.memory_space<vmem>>, %arg16: memref<1x128xf32, #tpu.memory_space<vmem>>, %arg17: memref<8x128xf32, #tpu.memory_space<vmem>>, %arg18: memref<8x128xf32, #tpu.memory_space<vmem>>) attributes {dimension_semantics = [#tpu.dimension_semantics<parallel>, #tpu.dimension_semantics<arbitrary>], iteration_bounds = array<i64: 1, 2>, scalar_prefetch = 0 : i64, scratch_operands = 1 : i64, tpu.core_type = #tpu.core_type<tc>, window_params = [{transform_indices = @transform_0, window_bounds = array<i64: 8, 128>}, {pipeline_mode = #tpu.pipeline_mode<synchronous>, transform_indices = @transform_1, window_bounds = array<i64: 128, 128>}, {pipeline_mode = #tpu.pipeline_mode<synchronous>, transform_indices = @transform_2, window_bounds = array<i64: 1, 128>}, {transform_indices = @transform_3, window_bounds = array<i64: 1, 128, 128>}, {transform_indices = @transform_4, window_bounds = array<i64: 1, 1, 128>}, {transform_indices = @transform_5, window_bounds = array<i64: 1, 128, 128>}, {transform_indices = @transform_6, window_bounds = array<i64: 1, 1, 128>}, {transform_indices = @transform_7, window_bounds = array<i64: 1, 128, 128>}, {transform_indices = @transform_8, window_bounds = array<i64: 1, 1, 128>}, {transform_indices = @transform_9, window_bounds = array<i64: 1, 1, 128>}, {transform_indices = @transform_10, window_bounds = array<i64: 1, 1, 128>}, {transform_indices = @transform_11, window_bounds = array<i64: 1, 1, 128>}, {transform_indices = @transform_12, window_bounds = array<i64: 1, 1, 128>}, {pipeline_mode = #tpu.pipeline_mode<synchronous>, transform_indices = @transform_13, window_bounds = array<i64: 128, 128>}, {pipeline_mode = #tpu.pipeline_mode<synchronous>, transform_indices = @transform_14, window_bounds = array<i64: 1, 128>}, {transform_indices = @transform_15, window_bounds = array<i64: 8, 128>}]} {
    %0 = tpu.iota {dimensions = array<i32: 1>} : vector<1x128xi32>
    %c64_i32 = arith.constant 64 : i32
    %1 = vector.broadcast %c64_i32 : i32 to vector<1x128xi32>
    %2 = arith.cmpi slt, %0, %1 : vector<1x128xi32>
    %3 = arith.extui %2 : vector<1x128xi1> to vector<1x128xi32>
    %4 = arith.sitofp %3 : vector<1x128xi32> to vector<1x128xf32>
    %c0_i32 = arith.constant 0 : i32
    %5 = arith.cmpi eq, %arg1, %c0_i32 : i32
    %6 = arith.extui %5 : i1 to i32
    %c0_i32_0 = arith.constant 0 : i32
    %7 = arith.cmpi ne, %6, %c0_i32_0 : i32
    scf.if %7 {
      %c0_48 = arith.constant 0 : index
      %c0_49 = arith.constant 0 : index
      %90 = vector.load %arg2[%c0_48, %c0_49] : memref<8x128xf32, #tpu.memory_space<vmem>>, vector<8x128xf32>
      %c0_50 = arith.constant 0 : index
      %c0_51 = arith.constant 0 : index
      %91 = vector.load %arg3[%c0_50, %c0_51] : memref<128x128xf32, #tpu.memory_space<vmem>>, vector<128x128xf32>
      %cst_52 = arith.constant dense<0.000000e+00> : vector<8x128xf32>
      %92 = tpu.matmul %90, %91, %cst_52 {dimension_numbers = #tpu.dot_dimension_numbers<[1], [0], [0], [1], [0, 0, 1, 1], [], []>} : vector<8x128xf32>, vector<128x128xf32>, vector<8x128xf32> -> vector<8x128xf32>
      %c0_53 = arith.constant 0 : index
      %c0_54 = arith.constant 0 : index
      %93 = vector.load %arg4[%c0_53, %c0_54] : memref<1x128xf32, #tpu.memory_space<vmem>>, vector<1x128xf32>
      %94 = vector.broadcast %93 : vector<1x128xf32> to vector<8x128xf32>
      %95 = arith.addf %92, %94 : vector<8x128xf32>
      %c0_55 = arith.constant 0 : index
      %c0_56 = arith.constant 0 : index
      %96 = vector.load %arg18[%c0_55, %c0_56] : memref<8x128xf32, #tpu.memory_space<vmem>>, vector<8x128xf32>
      tpu.vector_store %arg18[%c0_55, %c0_56], %95 {strides = array<i32>} : memref<8x128xf32, #tpu.memory_space<vmem>>, vector<8x128xf32>,
    } else {
    }
    %c0 = arith.constant 0 : index
    %c0_1 = arith.constant 0 : index
    %8 = vector.load %arg18[%c0, %c0_1] : memref<8x128xf32, #tpu.memory_space<vmem>>, vector<8x128xf32>
    %c0_2 = arith.constant 0 : index
    %c0_3 = arith.constant 0 : index
    %c0_4 = arith.constant 0 : index
    %9 = vector.load %arg5[%c0_2, %c0_3, %c0_4] : memref<1x128x128xf32, #tpu.memory_space<vmem>>, vector<1x128x128xf32>
    %10 = vector.shape_cast %9 : vector<1x128x128xf32> to vector<128x128xf32>
    %cst = arith.constant dense<0.000000e+00> : vector<8x128xf32>
    %11 = tpu.matmul %8, %10, %cst {dimension_numbers = #tpu.dot_dimension_numbers<[1], [0], [0], [1], [0, 0, 1, 1], [], []>} : vector<8x128xf32>, vector<128x128xf32>, vector<8x128xf32> -> vector<8x128xf32>
    %c0_5 = arith.constant 0 : index
    %c0_6 = arith.constant 0 : index
    %c0_7 = arith.constant 0 : index
    %12 = vector.load %arg6[%c0_5, %c0_6, %c0_7] : memref<1x1x128xf32, #tpu.memory_space<vmem>>, vector<1x1x128xf32>
    %13 = vector.shape_cast %12 : vector<1x1x128xf32> to vector<1x128xf32>
    %14 = vector.broadcast %13 : vector<1x128xf32> to vector<8x128xf32>
    %15 = arith.addf %11, %14 : vector<8x128xf32>
    %16 = arith.addf %8, %15 : vector<8x128xf32>
    %c0_8 = arith.constant 0 : index
    %c0_9 = arith.constant 0 : index
    %c0_10 = arith.constant 0 : index
    %17 = vector.load %arg11[%c0_8, %c0_9, %c0_10] : memref<1x1x128xf32, #tpu.memory_space<vmem>>, vector<1x1x128xf32>
    %18 = vector.shape_cast %17 : vector<1x1x128xf32> to vector<1x128xf32>
    %c0_11 = arith.constant 0 : index
    %c0_12 = arith.constant 0 : index
    %c0_13 = arith.constant 0 : index
    %19 = vector.load %arg12[%c0_11, %c0_12, %c0_13] : memref<1x1x128xf32, #tpu.memory_space<vmem>>, vector<1x1x128xf32>
    %20 = vector.shape_cast %19 : vector<1x1x128xf32> to vector<1x128xf32>
    %cst_14 = arith.constant dense<0.000000e+00> : vector<8xf32>
    %21 = vector.multi_reduction <add>, %16, %cst_14 [1] : vector<8x128xf32> to vector<8xf32>
    %22 = vector.shape_cast %21 : vector<8xf32> to vector<8x1xf32>
    %cst_15 = arith.constant 1.562500e-02 : f32
    %23 = vector.broadcast %cst_15 : f32 to vector<8x1xf32>
    %24 = arith.mulf %22, %23 : vector<8x1xf32>
    %25 = vector.broadcast %24 : vector<8x1xf32> to vector<8x128xf32>
    %26 = arith.subf %16, %25 : vector<8x128xf32>
    %27 = vector.broadcast %4 : vector<1x128xf32> to vector<8x128xf32>
    %28 = arith.mulf %26, %27 : vector<8x128xf32>
    %29 = arith.mulf %28, %28 : vector<8x128xf32>
    %cst_16 = arith.constant dense<0.000000e+00> : vector<8xf32>
    %30 = vector.multi_reduction <add>, %29, %cst_16 [1] : vector<8x128xf32> to vector<8xf32>
    %31 = vector.shape_cast %30 : vector<8xf32> to vector<8x1xf32>
    %cst_17 = arith.constant 1.562500e-02 : f32
    %32 = vector.broadcast %cst_17 : f32 to vector<8x1xf32>
    %33 = arith.mulf %31, %32 : vector<8x1xf32>
    %cst_18 = arith.constant 9.99999974E-6 : f32
    %34 = vector.broadcast %cst_18 : f32 to vector<8x1xf32>
    %35 = arith.addf %33, %34 : vector<8x1xf32>
    %36 = math.rsqrt %35 : vector<8x1xf32>
    %37 = vector.broadcast %36 : vector<8x1xf32> to vector<8x128xf32>
    %38 = arith.mulf %28, %37 : vector<8x128xf32>
    %39 = vector.broadcast %18 : vector<1x128xf32> to vector<8x128xf32>
    %40 = arith.mulf %38, %39 : vector<8x128xf32>
    %41 = vector.broadcast %20 : vector<1x128xf32> to vector<8x128xf32>
    %42 = arith.addf %40, %41 : vector<8x128xf32>
    %c0_19 = arith.constant 0 : index
    %c0_20 = arith.constant 0 : index
    %c0_21 = arith.constant 0 : index
    %43 = vector.load %arg7[%c0_19, %c0_20, %c0_21] : memref<1x128x128xf32, #tpu.memory_space<vmem>>, vector<1x128x128xf32>
    %44 = vector.shape_cast %43 : vector<1x128x128xf32> to vector<128x128xf32>
    %cst_22 = arith.constant dense<0.000000e+00> : vector<8x128xf32>
    %45 = tpu.matmul %42, %44, %cst_22 {dimension_numbers = #tpu.dot_dimension_numbers<[1], [0], [0], [1], [0, 0, 1, 1], [], []>} : vector<8x128xf32>, vector<128x128xf32>, vector<8x128xf32> -> vector<8x128xf32>
    %c0_23 = arith.constant 0 : index
    %c0_24 = arith.constant 0 : index
    %c0_25 = arith.constant 0 : index
    %46 = vector.load %arg8[%c0_23, %c0_24, %c0_25] : memref<1x1x128xf32, #tpu.memory_space<vmem>>, vector<1x1x128xf32>
    %47 = vector.shape_cast %46 : vector<1x1x128xf32> to vector<1x128xf32>
    %48 = vector.broadcast %47 : vector<1x128xf32> to vector<8x128xf32>
    %49 = arith.addf %45, %48 : vector<8x128xf32>
    %cst_26 = arith.constant 0.000000e+00 : f32
    %50 = vector.broadcast %cst_26 : f32 to vector<8x128xf32>
    %51 = arith.maximumf %49, %50 : vector<8x128xf32>
    %c0_27 = arith.constant 0 : index
    %c0_28 = arith.constant 0 : index
    %c0_29 = arith.constant 0 : index
    %52 = vector.load %arg9[%c0_27, %c0_28, %c0_29] : memref<1x128x128xf32, #tpu.memory_space<vmem>>, vector<1x128x128xf32>
    %53 = vector.shape_cast %52 : vector<1x128x128xf32> to vector<128x128xf32>
    %cst_30 = arith.constant dense<0.000000e+00> : vector<8x128xf32>
    %54 = tpu.matmul %51, %53, %cst_30 {dimension_numbers = #tpu.dot_dimension_numbers<[1], [0], [0], [1], [0, 0, 1, 1], [], []>} : vector<8x128xf32>, vector<128x128xf32>, vector<8x128xf32> -> vector<8x128xf32>
    %c0_31 = arith.constant 0 : index
    %c0_32 = arith.constant 0 : index
    %c0_33 = arith.constant 0 : index
    %55 = vector.load %arg10[%c0_31, %c0_32, %c0_33] : memref<1x1x128xf32, #tpu.memory_space<vmem>>, vector<1x1x128xf32>
    %56 = vector.shape_cast %55 : vector<1x1x128xf32> to vector<1x128xf32>
    %57 = vector.broadcast %56 : vector<1x128xf32> to vector<8x128xf32>
    %58 = arith.addf %54, %57 : vector<8x128xf32>
    %59 = arith.addf %42, %58 : vector<8x128xf32>
    %c0_34 = arith.constant 0 : index
    %c0_35 = arith.constant 0 : index
    %c0_36 = arith.constant 0 : index
    %60 = vector.load %arg13[%c0_34, %c0_35, %c0_36] : memref<1x1x128xf32, #tpu.memory_space<vmem>>, vector<1x1x128xf32>
    %61 = vector.shape_cast %60 : vector<1x1x128xf32> to vector<1x128xf32>
    %c0_37 = arith.constant 0 : index
    %c0_38 = arith.constant 0 : index
    %c0_39 = arith.constant 0 : index
    %62 = vector.load %arg14[%c0_37, %c0_38, %c0_39] : memref<1x1x128xf32, #tpu.memory_space<vmem>>, vector<1x1x128xf32>
    %63 = vector.shape_cast %62 : vector<1x1x128xf32> to vector<1x128xf32>
    %cst_40 = arith.constant dense<0.000000e+00> : vector<8xf32>
    %64 = vector.multi_reduction <add>, %59, %cst_40 [1] : vector<8x128xf32> to vector<8xf32>
    %65 = vector.shape_cast %64 : vector<8xf32> to vector<8x1xf32>
    %cst_41 = arith.constant 1.562500e-02 : f32
    %66 = vector.broadcast %cst_41 : f32 to vector<8x1xf32>
    %67 = arith.mulf %65, %66 : vector<8x1xf32>
    %68 = vector.broadcast %67 : vector<8x1xf32> to vector<8x128xf32>
    %69 = arith.subf %59, %68 : vector<8x128xf32>
    %70 = vector.broadcast %4 : vector<1x128xf32> to vector<8x128xf32>
    %71 = arith.mulf %69, %70 : vector<8x128xf32>
    %72 = arith.mulf %71, %71 : vector<8x128xf32>
    %cst_42 = arith.constant dense<0.000000e+00> : vector<8xf32>
    %73 = vector.multi_reduction <add>, %72, %cst_42 [1] : vector<8x128xf32> to vector<8xf32>
    %74 = vector.shape_cast %73 : vector<8xf32> to vector<8x1xf32>
    %cst_43 = arith.constant 1.562500e-02 : f32
    %75 = vector.broadcast %cst_43 : f32 to vector<8x1xf32>
    %76 = arith.mulf %74, %75 : vector<8x1xf32>
    %cst_44 = arith.constant 9.99999974E-6 : f32
    %77 = vector.broadcast %cst_44 : f32 to vector<8x1xf32>
    %78 = arith.addf %76, %77 : vector<8x1xf32>
    %79 = math.rsqrt %78 : vector<8x1xf32>
    %80 = vector.broadcast %79 : vector<8x1xf32> to vector<8x128xf32>
    %81 = arith.mulf %71, %80 : vector<8x128xf32>
    %82 = vector.broadcast %61 : vector<1x128xf32> to vector<8x128xf32>
    %83 = arith.mulf %81, %82 : vector<8x128xf32>
    %84 = vector.broadcast %63 : vector<1x128xf32> to vector<8x128xf32>
    %85 = arith.addf %83, %84 : vector<8x128xf32>
    %c0_45 = arith.constant 0 : index
    %c0_46 = arith.constant 0 : index
    %86 = vector.load %arg18[%c0_45, %c0_46] : memref<8x128xf32, #tpu.memory_space<vmem>>, vector<8x128xf32>
    tpu.vector_store %arg18[%c0_45, %c0_46], %85 {strides = array<i32>} : memref<8x128xf32, #tpu.memory_space<vmem>>, vector<8x128xf32>,
    %c1_i32 = arith.constant 1 : i32
    %87 = arith.cmpi eq, %arg1, %c1_i32 : i32
    %88 = arith.extui %87 : i1 to i32
    %c0_i32_47 = arith.constant 0 : i32
    %89 = arith.cmpi ne, %88, %c0_i32_47 : i32
    scf.if %89 {
      %c0_48 = arith.constant 0 : index
      %c0_49 = arith.constant 0 : index
      %90 = vector.load %arg15[%c0_48, %c0_49] : memref<128x128xf32, #tpu.memory_space<vmem>>, vector<128x128xf32>
      %cst_50 = arith.constant dense<0.000000e+00> : vector<8x128xf32>
      %91 = tpu.matmul %85, %90, %cst_50 {dimension_numbers = #tpu.dot_dimension_numbers<[1], [0], [0], [1], [0, 0, 1, 1], [], []>} : vector<8x128xf32>, vector<128x128xf32>, vector<8x128xf32> -> vector<8x128xf32>
      %c0_51 = arith.constant 0 : index
      %c0_52 = arith.constant 0 : index
      %92 = vector.load %arg16[%c0_51, %c0_52] : memref<1x128xf32, #tpu.memory_space<vmem>>, vector<1x128xf32>
      %93 = vector.broadcast %92 : vector<1x128xf32> to vector<8x128xf32>
      %94 = arith.addf %91, %93 : vector<8x128xf32>
      %c0_53 = arith.constant 0 : index
      %c0_54 = arith.constant 0 : index
      %95 = vector.load %arg17[%c0_53, %c0_54] : memref<8x128xf32, #tpu.memory_space<vmem>>, vector<8x128xf32>
      tpu.vector_store %arg17[%c0_53, %c0_54], %94 {strides = array<i32>} : memref<8x128xf32, #tpu.memory_space<vmem>>, vector<8x128xf32>,
    } else {
    }
    return
  }
  func.func @transform_0(%arg0: i32, %arg1: i32) -> (i32, i32) {
    %c0_i32 = arith.constant 0 : i32
    %c0_i32_0 = arith.constant 0 : i32
    return %arg0, %c0_i32 : i32, i32
  }
  func.func @transform_1(%arg0: i32, %arg1: i32) -> (i32, i32) {
    %c0_i32 = arith.constant 0 : i32
    %c0_i32_0 = arith.constant 0 : i32
    %c0_i32_1 = arith.constant 0 : i32
    return %c0_i32, %c0_i32_0 : i32, i32
  }
  func.func @transform_2(%arg0: i32, %arg1: i32) -> (i32, i32) {
    %c0_i32 = arith.constant 0 : i32
    %c0_i32_0 = arith.constant 0 : i32
    %c0_i32_1 = arith.constant 0 : i32
    return %c0_i32, %c0_i32_0 : i32, i32
  }
  func.func @transform_3(%arg0: i32, %arg1: i32) -> (i32, i32, i32) {
    %c0_i32 = arith.constant 0 : i32
    %c0_i32_0 = arith.constant 0 : i32
    %c0_i32_1 = arith.constant 0 : i32
    return %arg1, %c0_i32, %c0_i32_0 : i32, i32, i32
  }
  func.func @transform_4(%arg0: i32, %arg1: i32) -> (i32, i32, i32) {
    %c0_i32 = arith.constant 0 : i32
    %c0_i32_0 = arith.constant 0 : i32
    %c0_i32_1 = arith.constant 0 : i32
    return %arg1, %c0_i32, %c0_i32_0 : i32, i32, i32
  }
  func.func @transform_5(%arg0: i32, %arg1: i32) -> (i32, i32, i32) {
    %c0_i32 = arith.constant 0 : i32
    %c0_i32_0 = arith.constant 0 : i32
    %c0_i32_1 = arith.constant 0 : i32
    return %arg1, %c0_i32, %c0_i32_0 : i32, i32, i32
  }
  func.func @transform_6(%arg0: i32, %arg1: i32) -> (i32, i32, i32) {
    %c0_i32 = arith.constant 0 : i32
    %c0_i32_0 = arith.constant 0 : i32
    %c0_i32_1 = arith.constant 0 : i32
    return %arg1, %c0_i32, %c0_i32_0 : i32, i32, i32
  }
  func.func @transform_7(%arg0: i32, %arg1: i32) -> (i32, i32, i32) {
    %c0_i32 = arith.constant 0 : i32
    %c0_i32_0 = arith.constant 0 : i32
    %c0_i32_1 = arith.constant 0 : i32
    return %arg1, %c0_i32, %c0_i32_0 : i32, i32, i32
  }
  func.func @transform_8(%arg0: i32, %arg1: i32) -> (i32, i32, i32) {
    %c0_i32 = arith.constant 0 : i32
    %c0_i32_0 = arith.constant 0 : i32
    %c0_i32_1 = arith.constant 0 : i32
    return %arg1, %c0_i32, %c0_i32_0 : i32, i32, i32
  }
  func.func @transform_9(%arg0: i32, %arg1: i32) -> (i32, i32, i32) {
    %c0_i32 = arith.constant 0 : i32
    %c0_i32_0 = arith.constant 0 : i32
    %c0_i32_1 = arith.constant 0 : i32
    return %arg1, %c0_i32, %c0_i32_0 : i32, i32, i32
  }
  func.func @transform_10(%arg0: i32, %arg1: i32) -> (i32, i32, i32) {
    %c0_i32 = arith.constant 0 : i32
    %c0_i32_0 = arith.constant 0 : i32
    %c0_i32_1 = arith.constant 0 : i32
    return %arg1, %c0_i32, %c0_i32_0 : i32, i32, i32
  }
  func.func @transform_11(%arg0: i32, %arg1: i32) -> (i32, i32, i32) {
    %c0_i32 = arith.constant 0 : i32
    %c0_i32_0 = arith.constant 0 : i32
    %c0_i32_1 = arith.constant 0 : i32
    return %arg1, %c0_i32, %c0_i32_0 : i32, i32, i32
  }
  func.func @transform_12(%arg0: i32, %arg1: i32) -> (i32, i32, i32) {
    %c0_i32 = arith.constant 0 : i32
    %c0_i32_0 = arith.constant 0 : i32
    %c0_i32_1 = arith.constant 0 : i32
    return %arg1, %c0_i32, %c0_i32_0 : i32, i32, i32
  }
  func.func @transform_13(%arg0: i32, %arg1: i32) -> (i32, i32) {
    %c0_i32 = arith.constant 0 : i32
    %c0_i32_0 = arith.constant 0 : i32
    %c0_i32_1 = arith.constant 0 : i32
    return %c0_i32, %c0_i32_0 : i32, i32
  }
  func.func @transform_14(%arg0: i32, %arg1: i32) -> (i32, i32) {
    %c0_i32 = arith.constant 0 : i32
    %c0_i32_0 = arith.constant 0 : i32
    %c0_i32_1 = arith.constant 0 : i32
    return %c0_i32, %c0_i32_0 : i32, i32
  }
  func.func @transform_15(%arg0: i32, %arg1: i32) -> (i32, i32) {
    %c0_i32 = arith.constant 0 : i32
    %c0_i32_0 = arith.constant 0 : i32
    return %arg0, %c0_i32 : i32, i32
  }
}

</mosaic_0001>

<llo_original>
// kernel: tpu_custom_call.1
$region0: #{tpu_custom_call.1}
  #allocation0 [shape = 'u32[]', space=smem, size = 0x4, offset = 0x4, fixed_abs, tag = 'smem constant byte address 0x4 - core index']
  #allocation1 [shape = 'u32[144,128]{1,0:T(1,128)}', space=vmem, size = 0x12000, scoped, tag = 'internal scratch']
  #allocation2 [shape = 'f32[8,128]{1,0:T(8,128)}', space=vmem, size = 0x1000, scoped, tag = 'scratch operand']
  %s0 = inlined_call_operand.hbm [shape: f32[8,128], index: 0, kind: input, shape index: {}]
  %s1 = inlined_call_operand.hbm [shape: f32[128,128], index: 1, kind: input, shape index: {}]
  %s2 = inlined_call_operand.vmem [shape: f32[1,128], index: 2, kind: input, shape index: {}]
  %s3 = inlined_call_operand.hbm [shape: f32[2,128,128], index: 3, kind: input, shape index: {}]
  %s4 = inlined_call_operand.vmem [shape: f32[2,1,128], index: 4, kind: input, shape index: {}]
  %s5 = inlined_call_operand.hbm [shape: f32[2,128,128], index: 5, kind: input, shape index: {}]
  %s6 = inlined_call_operand.vmem [shape: f32[2,1,128], index: 6, kind: input, shape index: {}]
  %s7 = inlined_call_operand.hbm [shape: f32[2,128,128], index: 7, kind: input, shape index: {}]
  %s8 = inlined_call_operand.vmem [shape: f32[2,1,128], index: 8, kind: input, shape index: {}]
  %s9 = inlined_call_operand.vmem [shape: f32[2,1,128], index: 9, kind: input, shape index: {}]
  %s10 = inlined_call_operand.vmem [shape: f32[2,1,128], index: 10, kind: input, shape index: {}]
  %s11 = inlined_call_operand.vmem [shape: f32[2,1,128], index: 11, kind: input, shape index: {}]
  %s12 = inlined_call_operand.vmem [shape: f32[2,1,128], index: 12, kind: input, shape index: {}]
  %s13 = inlined_call_operand.hbm [shape: f32[128,128], index: 13, kind: input, shape index: {}]
  %s14 = inlined_call_operand.vmem [shape: f32[1,128], index: 14, kind: input, shape index: {}]
  %s15 = inlined_call_operand.hbm [shape: f32[8,128], index: 15, kind: output, shape index: {}]
  %s16 = sld [smem:[#allocation0]]
  $region125: #{tpu_custom_call.1} parent=0
    _
  %s18 = ssub.s32 1, %s16
  %s19 = scalar_select 0, %s18, %s16
  $region1: #{tpu_custom_call.1} parent=0
    #allocation3 [shape = 'u8[4096]{0}', space=vmem, size = 0x1000, scoped, tag = 'input window, operand 0, single buffered']
    #allocation4 [shape = 's32[2]{0}', space=sflag, size = 0x8, scoped, tag = 'scoped memory for tpu_custom_call.1']
    #allocation5 [shape = 's32[2]{0}', space=sflag, size = 0x8, scoped, tag = 'scoped memory for tpu_custom_call.1']
    #allocation6 [shape = 'u8[65536]{0}', space=vmem, size = 0x10000, scoped, tag = 'input window, operand 1, single buffered']
    #allocation7 [shape = 's32[1]{0}', space=sflag, size = 0x4, scoped, tag = 'scoped memory for tpu_custom_call.1']
    #allocation8 [shape = 'u8[131072]{0}', space=vmem, size = 0x20000, scoped, tag = 'input window, operand 3']
    #allocation9 [shape = 'u8[131072]{0}', space=vmem, size = 0x20000, scoped, tag = 'input window, operand 5']
    #allocation10 [shape = 'u8[131072]{0}', space=vmem, size = 0x20000, scoped, tag = 'input window, operand 7']
    #allocation11 [shape = 'u8[65536]{0}', space=vmem, size = 0x10000, scoped, tag = 'input window, operand 13, single buffered']
    #allocation12 [shape = 'u8[4096]{0}', space=vmem, size = 0x1000, scoped, tag = 'output window, operand 0, single buffered']
    %20 = vsyncpa [#allocation4], 0
    %21 = vsyncpa [#allocation7], 0
    %22 = vsyncpa [#allocation5], 0
    loop: start=0, step=1, limit=4
    $region2: #{tpu_custom_call.1} parent=1 // loop_pre_header
      _
    $region3: #{tpu_custom_call.1} parent=1 // loop_header
      %s24 = sphi 0, %s28
      %p25 = scmp.ge.s32.totalorder %s24, 4
      %s31 = sphi 0, %s43
      %s32 = sphi 0, %s39
      %s33 = sphi 0, %s31
      %s34 = sphi 0, %s32
      %s35 = sphi 0, %s33
      %s36 = sphi 0, %s34
      %s46 = sphi 0, %s48
      %s49 = sphi 0, %s46
      %s50 = sphi 0, %s49
      %s66 = sphi 0, %s50
      %s70 = sphi 0, %s70
      %s72 = sphi 0, %s70
      %s73 = sphi 0, %s72
      %s87 = sphi 0, %s73
      %s91 = sphi 0, %s91
      %s93 = sphi 0, %s91
      %s94 = sphi 0, %s93
      %s108 = sphi 0, %s94
      %s114 = sphi 0, %s116
      %s117 = sphi 0, %s114
      %s118 = sphi 0, %s117
      %s134 = sphi 0, %s118
      %s140 = sphi 0, %s142
      %s143 = sphi 0, %s140
      %s144 = sphi 0, %s143
      %s160 = sphi 0, %s144
      %s166 = sphi 0, %s168
      %s169 = sphi 0, %s166
      %s170 = sphi 0, %s169
      %s186 = sphi 0, %s170
      %s192 = sphi 0, %s194
      %s195 = sphi 0, %s192
      %s196 = sphi 0, %s195
      %s212 = sphi 0, %s196
      %s218 = sphi 0, %s220
      %s221 = sphi 0, %s218
      %s222 = sphi 0, %s221
      %s238 = sphi 0, %s222
      %s244 = sphi 0, %s246
      %s247 = sphi 0, %s244
      %s248 = sphi 0, %s247
      %s264 = sphi 0, %s248
      %s270 = sphi 0, %s272
      %s273 = sphi 0, %s270
      %s274 = sphi 0, %s273
      %s290 = sphi 0, %s274
      %s296 = sphi 0, %s298
      %s299 = sphi 0, %s296
      %s300 = sphi 0, %s299
      %s316 = sphi 0, %s300
      %s322 = sphi 0, %s324
      %s325 = sphi 0, %s322
      %s326 = sphi 0, %s325
      %s342 = sphi 0, %s326
      %s348 = sphi 0, %s350
      %s351 = sphi 0, %s348
      %s352 = sphi 0, %s351
      %s368 = sphi 0, %s352
      %s372 = sphi 0, %s372
      %s374 = sphi 0, %s372
      %s375 = sphi 0, %s374
      %s389 = sphi 0, %s375
      %s393 = sphi 0, %s393
      %s395 = sphi 0, %s393
      %s396 = sphi 0, %s395
      %s410 = sphi 0, %s396
      %s416 = sphi 0, %s418
      %s419 = sphi 0, %s416
      %s420 = sphi 0, %s419
      %s436 = sphi 0, %s420
    $region4: #{tpu_custom_call.1} parent=1 // loop_header_branch
      %27 = sbr.rel (%p25) target = $region8
    $region5: #{tpu_custom_call.1} parent=1 // loop_body
      %s29 = ssub.s32 %s24, 1
      %s30 = ssub.s32 %s24, 2
      %s37 = sadd.s32 1, %s32
      %p38 = scmp.ge.s32.totalorder %s37, 2
      %s39 = scalar_select %p38, 0, %s37
      %s40 = sadd.s32 1, %s31
      %s41 = scalar_select %p38, %s40, %s31
      %p42 = scmp.ge.s32.totalorder %s41, 1
      %s43 = scalar_select %p42, 0, %s41
      %s44 = ssub.s32 %s31, %s43
      %p45 = scmp.eq.s32.totalorder %s44, 0
      %s47 = sadd.s32 %s46, 1
      %s48 = scalar_select %p45, %s46, %s47
      %p51 = pneg %p45
      %p52 = scmp.eq.s32.totalorder %s24, 1
      %p53 = por %p51, %p52
      %p54 = scmp.ne.s32.totalorder %s46, %s49
      %p55 = scmp.eq.s32.totalorder %s24, 0
      %p56 = por %p54, %p55
      %p57 = scmp.ne.s32.totalorder %s46, %s49
      %p58 = scmp.eq.s32.totalorder %s29, 1
      %p59 = por %p57, %p58
      %p60 = scmp.ne.s32.totalorder %s49, %s50
      %p61 = scmp.eq.s32.totalorder %s29, 0
      %p62 = por %p60, %p61
      %p63 = scmp.ne.s32.totalorder %s49, %s50
      %p64 = scmp.eq.s32.totalorder %s30, 1
      %p65 = por %p63, %p64
      %p67 = scmp.ne.s32.totalorder %s50, %s66
      %p68 = scmp.eq.s32.totalorder %s30, 0
      %p69 = por %p67, %p68
      %s71 = sadd.s32 %s70, 1
      %p74 = scmp.eq.s32.totalorder %s24, 1
      %p75 = scmp.ne.s32.totalorder %s70, %s72
      %p76 = scmp.eq.s32.totalorder %s24, 0
      %p77 = por %p75, %p76
      %p78 = scmp.ne.s32.totalorder %s70, %s72
      %p79 = scmp.eq.s32.totalorder %s29, 1
      %p80 = por %p78, %p79
      %p81 = scmp.ne.s32.totalorder %s72, %s73
      %p82 = scmp.eq.s32.totalorder %s29, 0
      %p83 = por %p81, %p82
      %p84 = scmp.ne.s32.totalorder %s72, %s73
      %p85 = scmp.eq.s32.totalorder %s30, 1
      %p86 = por %p84, %p85
      %p88 = scmp.ne.s32.totalorder %s73, %s87
      %p89 = scmp.eq.s32.totalorder %s30, 0
      %p90 = por %p88, %p89
      %s92 = sadd.s32 %s91, 1
      %p95 = scmp.eq.s32.totalorder %s24, 1
      %p96 = scmp.ne.s32.totalorder %s91, %s93
      %p97 = scmp.eq.s32.totalorder %s24, 0
      %p98 = por %p96, %p97
      %p99 = scmp.ne.s32.totalorder %s91, %s93
      %p100 = scmp.eq.s32.totalorder %s29, 1
      %p101 = por %p99, %p100
      %p102 = scmp.ne.s32.totalorder %s93, %s94
      %p103 = scmp.eq.s32.totalorder %s29, 0
      %p104 = por %p102, %p103
      %p105 = scmp.ne.s32.totalorder %s93, %s94
      %p106 = scmp.eq.s32.totalorder %s30, 1
      %p107 = por %p105, %p106
      %p109 = scmp.ne.s32.totalorder %s94, %s108
      %p110 = scmp.eq.s32.totalorder %s30, 0
      %p111 = por %p109, %p110
      %s112 = ssub.s32 %s32, %s39
      %p113 = scmp.eq.s32.totalorder %s112, 0
      %s115 = sadd.s32 %s114, 1
      %s116 = scalar_select %p113, %s114, %s115
      %p119 = pneg %p113
      %p120 = scmp.eq.s32.totalorder %s24, 1
      %p121 = por %p119, %p120
      %p122 = scmp.ne.s32.totalorder %s114, %s117
      %p123 = scmp.eq.s32.totalorder %s24, 0
      %p124 = por %p122, %p123
      %p125 = scmp.ne.s32.totalorder %s114, %s117
      %p126 = scmp.eq.s32.totalorder %s29, 1
      %p127 = por %p125, %p126
      %p128 = scmp.ne.s32.totalorder %s117, %s118
      %p129 = scmp.eq.s32.totalorder %s29, 0
      %p130 = por %p128, %p129
      %p131 = scmp.ne.s32.totalorder %s117, %s118
      %p132 = scmp.eq.s32.totalorder %s30, 1
      %p133 = por %p131, %p132
      %p135 = scmp.ne.s32.totalorder %s118, %s134
      %p136 = scmp.eq.s32.totalorder %s30, 0
      %p137 = por %p135, %p136
      %s138 = ssub.s32 %s32, %s39
      %p139 = scmp.eq.s32.totalorder %s138, 0
      %s141 = sadd.s32 %s140, 1
      %s142 = scalar_select %p139, %s140, %s141
      %p145 = pneg %p139
      %p146 = scmp.eq.s32.totalorder %s24, 1
      %p147 = por %p145, %p146
      %p148 = scmp.ne.s32.totalorder %s140, %s143
      %p149 = scmp.eq.s32.totalorder %s24, 0
      %p150 = por %p148, %p149
      %p151 = scmp.ne.s32.totalorder %s140, %s143
      %p152 = scmp.eq.s32.totalorder %s29, 1
      %p153 = por %p151, %p152
      %p154 = scmp.ne.s32.totalorder %s143, %s144
      %p155 = scmp.eq.s32.totalorder %s29, 0
      %p156 = por %p154, %p155
      %p157 = scmp.ne.s32.totalorder %s143, %s144
      %p158 = scmp.eq.s32.totalorder %s30, 1
      %p159 = por %p157, %p158
      %p161 = scmp.ne.s32.totalorder %s144, %s160
      %p162 = scmp.eq.s32.totalorder %s30, 0
      %p163 = por %p161, %p162
      %s164 = ssub.s32 %s32, %s39
      %p165 = scmp.eq.s32.totalorder %s164, 0
      %s167 = sadd.s32 %s166, 1
      %s168 = scalar_select %p165, %s166, %s167
      %p171 = pneg %p165
      %p172 = scmp.eq.s32.totalorder %s24, 1
      %p173 = por %p171, %p172
      %p174 = scmp.ne.s32.totalorder %s166, %s169
      %p175 = scmp.eq.s32.totalorder %s24, 0
      %p176 = por %p174, %p175
      %p177 = scmp.ne.s32.totalorder %s166, %s169
      %p178 = scmp.eq.s32.totalorder %s29, 1
      %p179 = por %p177, %p178
      %p180 = scmp.ne.s32.totalorder %s169, %s170
      %p181 = scmp.eq.s32.totalorder %s29, 0
      %p182 = por %p180, %p181
      %p183 = scmp.ne.s32.totalorder %s169, %s170
      %p184 = scmp.eq.s32.totalorder %s30, 1
      %p185 = por %p183, %p184
      %p187 = scmp.ne.s32.totalorder %s170, %s186
      %p188 = scmp.eq.s32.totalorder %s30, 0
      %p189 = por %p187, %p188
      %s190 = ssub.s32 %s32, %s39
      %p191 = scmp.eq.s32.totalorder %s190, 0
      %s193 = sadd.s32 %s192, 1
      %s194 = scalar_select %p191, %s192, %s193
      %p197 = pneg %p191
      %p198 = scmp.eq.s32.totalorder %s24, 1
      %p199 = por %p197, %p198
      %p200 = scmp.ne.s32.totalorder %s192, %s195
      %p201 = scmp.eq.s32.totalorder %s24, 0
      %p202 = por %p200, %p201
      %p203 = scmp.ne.s32.totalorder %s192, %s195
      %p204 = scmp.eq.s32.totalorder %s29, 1
      %p205 = por %p203, %p204
      %p206 = scmp.ne.s32.totalorder %s195, %s196
      %p207 = scmp.eq.s32.totalorder %s29, 0
      %p208 = por %p206, %p207
      %p209 = scmp.ne.s32.totalorder %s195, %s196
      %p210 = scmp.eq.s32.totalorder %s30, 1
      %p211 = por %p209, %p210
      %p213 = scmp.ne.s32.totalorder %s196, %s212
      %p214 = scmp.eq.s32.totalorder %s30, 0
      %p215 = por %p213, %p214
      %s216 = ssub.s32 %s32, %s39
      %p217 = scmp.eq.s32.totalorder %s216, 0
      %s219 = sadd.s32 %s218, 1
      %s220 = scalar_select %p217, %s218, %s219
      %p223 = pneg %p217
      %p224 = scmp.eq.s32.totalorder %s24, 1
      %p225 = por %p223, %p224
      %p226 = scmp.ne.s32.totalorder %s218, %s221
      %p227 = scmp.eq.s32.totalorder %s24, 0
      %p228 = por %p226, %p227
      %p229 = scmp.ne.s32.totalorder %s218, %s221
      %p230 = scmp.eq.s32.totalorder %s29, 1
      %p231 = por %p229, %p230
      %p232 = scmp.ne.s32.totalorder %s221, %s222
      %p233 = scmp.eq.s32.totalorder %s29, 0
      %p234 = por %p232, %p233
      %p235 = scmp.ne.s32.totalorder %s221, %s222
      %p236 = scmp.eq.s32.totalorder %s30, 1
      %p237 = por %p235, %p236
      %p239 = scmp.ne.s32.totalorder %s222, %s238
      %p240 = scmp.eq.s32.totalorder %s30, 0
      %p241 = por %p239, %p240
      %s242 = ssub.s32 %s32, %s39
      %p243 = scmp.eq.s32.totalorder %s242, 0
      %s245 = sadd.s32 %s244, 1
      %s246 = scalar_select %p243, %s244, %s245
      %p249 = pneg %p243
      %p250 = scmp.eq.s32.totalorder %s24, 1
      %p251 = por %p249, %p250
      %p252 = scmp.ne.s32.totalorder %s244, %s247
      %p253 = scmp.eq.s32.totalorder %s24, 0
      %p254 = por %p252, %p253
      %p255 = scmp.ne.s32.totalorder %s244, %s247
      %p256 = scmp.eq.s32.totalorder %s29, 1
      %p257 = por %p255, %p256
      %p258 = scmp.ne.s32.totalorder %s247, %s248
      %p259 = scmp.eq.s32.totalorder %s29, 0
      %p260 = por %p258, %p259
      %p261 = scmp.ne.s32.totalorder %s247, %s248
      %p262 = scmp.eq.s32.totalorder %s30, 1
      %p263 = por %p261, %p262
      %p265 = scmp.ne.s32.totalorder %s248, %s264
      %p266 = scmp.eq.s32.totalorder %s30, 0
      %p267 = por %p265, %p266
      %s268 = ssub.s32 %s32, %s39
      %p269 = scmp.eq.s32.totalorder %s268, 0
      %s271 = sadd.s32 %s270, 1
      %s272 = scalar_select %p269, %s270, %s271
      %p275 = pneg %p269
      %p276 = scmp.eq.s32.totalorder %s24, 1
      %p277 = por %p275, %p276
      %p278 = scmp.ne.s32.totalorder %s270, %s273
      %p279 = scmp.eq.s32.totalorder %s24, 0
      %p280 = por %p278, %p279
      %p281 = scmp.ne.s32.totalorder %s270, %s273
      %p282 = scmp.eq.s32.totalorder %s29, 1
      %p283 = por %p281, %p282
      %p284 = scmp.ne.s32.totalorder %s273, %s274
      %p285 = scmp.eq.s32.totalorder %s29, 0
      %p286 = por %p284, %p285
      %p287 = scmp.ne.s32.totalorder %s273, %s274
      %p288 = scmp.eq.s32.totalorder %s30, 1
      %p289 = por %p287, %p288
      %p291 = scmp.ne.s32.totalorder %s274, %s290
      %p292 = scmp.eq.s32.totalorder %s30, 0
      %p293 = por %p291, %p292
      %s294 = ssub.s32 %s32, %s39
      %p295 = scmp.eq.s32.totalorder %s294, 0
      %s297 = sadd.s32 %s296, 1
      %s298 = scalar_select %p295, %s296, %s297
      %p301 = pneg %p295
      %p302 = scmp.eq.s32.totalorder %s24, 1
      %p303 = por %p301, %p302
      %p304 = scmp.ne.s32.totalorder %s296, %s299
      %p305 = scmp.eq.s32.totalorder %s24, 0
      %p306 = por %p304, %p305
      %p307 = scmp.ne.s32.totalorder %s296, %s299
      %p308 = scmp.eq.s32.totalorder %s29, 1
      %p309 = por %p307, %p308
      %p310 = scmp.ne.s32.totalorder %s299, %s300
      %p311 = scmp.eq.s32.totalorder %s29, 0
      %p312 = por %p310, %p311
      %p313 = scmp.ne.s32.totalorder %s299, %s300
      %p314 = scmp.eq.s32.totalorder %s30, 1
      %p315 = por %p313, %p314
      %p317 = scmp.ne.s32.totalorder %s300, %s316
      %p318 = scmp.eq.s32.totalorder %s30, 0
      %p319 = por %p317, %p318
      %s320 = ssub.s32 %s32, %s39
      %p321 = scmp.eq.s32.totalorder %s320, 0
      %s323 = sadd.s32 %s322, 1
      %s324 = scalar_select %p321, %s322, %s323
      %p327 = pneg %p321
      %p328 = scmp.eq.s32.totalorder %s24, 1
      %p329 = por %p327, %p328
      %p330 = scmp.ne.s32.totalorder %s322, %s325
      %p331 = scmp.eq.s32.totalorder %s24, 0
      %p332 = por %p330, %p331
      %p333 = scmp.ne.s32.totalorder %s322, %s325
      %p334 = scmp.eq.s32.totalorder %s29, 1
      %p335 = por %p333, %p334
      %p336 = scmp.ne.s32.totalorder %s325, %s326
      %p337 = scmp.eq.s32.totalorder %s29, 0
      %p338 = por %p336, %p337
      %p339 = scmp.ne.s32.totalorder %s325, %s326
      %p340 = scmp.eq.s32.totalorder %s30, 1
      %p341 = por %p339, %p340
      %p343 = scmp.ne.s32.totalorder %s326, %s342
      %p344 = scmp.eq.s32.totalorder %s30, 0
      %p345 = por %p343, %p344
      %s346 = ssub.s32 %s32, %s39
      %p347 = scmp.eq.s32.totalorder %s346, 0
      %s349 = sadd.s32 %s348, 1
      %s350 = scalar_select %p347, %s348, %s349
      %p353 = pneg %p347
      %p354 = scmp.eq.s32.totalorder %s24, 1
      %p355 = por %p353, %p354
      %p356 = scmp.ne.s32.totalorder %s348, %s351
      %p357 = scmp.eq.s32.totalorder %s24, 0
      %p358 = por %p356, %p357
      %p359 = scmp.ne.s32.totalorder %s348, %s351
      %p360 = scmp.eq.s32.totalorder %s29, 1
      %p361 = por %p359, %p360
      %p362 = scmp.ne.s32.totalorder %s351, %s352
      %p363 = scmp.eq.s32.totalorder %s29, 0
      %p364 = por %p362, %p363
      %p365 = scmp.ne.s32.totalorder %s351, %s352
      %p366 = scmp.eq.s32.totalorder %s30, 1
      %p367 = por %p365, %p366
      %p369 = scmp.ne.s32.totalorder %s352, %s368
      %p370 = scmp.eq.s32.totalorder %s30, 0
      %p371 = por %p369, %p370
      %s373 = sadd.s32 %s372, 1
      %p376 = scmp.eq.s32.totalorder %s24, 1
      %p377 = scmp.ne.s32.totalorder %s372, %s374
      %p378 = scmp.eq.s32.totalorder %s24, 0
      %p379 = por %p377, %p378
      %p380 = scmp.ne.s32.totalorder %s372, %s374
      %p381 = scmp.eq.s32.totalorder %s29, 1
      %p382 = por %p380, %p381
      %p383 = scmp.ne.s32.totalorder %s374, %s375
      %p384 = scmp.eq.s32.totalorder %s29, 0
      %p385 = por %p383, %p384
      %p386 = scmp.ne.s32.totalorder %s374, %s375
      %p387 = scmp.eq.s32.totalorder %s30, 1
      %p388 = por %p386, %p387
      %p390 = scmp.ne.s32.totalorder %s375, %s389
      %p391 = scmp.eq.s32.totalorder %s30, 0
      %p392 = por %p390, %p391
      %s394 = sadd.s32 %s393, 1
      %p397 = scmp.eq.s32.totalorder %s24, 1
      %p398 = scmp.ne.s32.totalorder %s393, %s395
      %p399 = scmp.eq.s32.totalorder %s24, 0
      %p400 = por %p398, %p399
      %p401 = scmp.ne.s32.totalorder %s393, %s395
      %p402 = scmp.eq.s32.totalorder %s29, 1
      %p403 = por %p401, %p402
      %p404 = scmp.ne.s32.totalorder %s395, %s396
      %p405 = scmp.eq.s32.totalorder %s29, 0
      %p406 = por %p404, %p405
      %p407 = scmp.ne.s32.totalorder %s395, %s396
      %p408 = scmp.eq.s32.totalorder %s30, 1
      %p409 = por %p407, %p408
      %p411 = scmp.ne.s32.totalorder %s396, %s410
      %p412 = scmp.eq.s32.totalorder %s30, 0
      %p413 = por %p411, %p412
      %s414 = ssub.s32 %s31, %s43
      %p415 = scmp.eq.s32.totalorder %s414, 0
      %s417 = sadd.s32 %s416, 1
      %s418 = scalar_select %p415, %s416, %s417
      %p421 = pneg %p415
      %p422 = scmp.eq.s32.totalorder %s24, 1
      %p423 = por %p421, %p422
      %p424 = scmp.ne.s32.totalorder %s416, %s419
      %p425 = scmp.eq.s32.totalorder %s24, 0
      %p426 = por %p424, %p425
      %p427 = scmp.ne.s32.totalorder %s416, %s419
      %p428 = scmp.eq.s32.totalorder %s29, 1
      %p429 = por %p427, %p428
      %p430 = scmp.ne.s32.totalorder %s419, %s420
      %p431 = scmp.eq.s32.totalorder %s29, 0
      %p432 = por %p430, %p431
      %p433 = scmp.ne.s32.totalorder %s419, %s420
      %p434 = scmp.eq.s32.totalorder %s30, 1
      %p435 = por %p433, %p434
      %p437 = scmp.ne.s32.totalorder %s420, %s436
      %p438 = scmp.eq.s32.totalorder %s30, 0
      %p439 = por %p437, %p438
      %p440 = scmp.le.s32.totalorder 1, %s24
      %p441 = scmp.lt.s32.totalorder %s24, 3
      %p442 = pnand %p440, %p441
      %p443 = pneg %p442
      // Predicated region
      $region9: #{tpu_custom_call.1} parent=5 // pred_check
        _
      $region10: #{tpu_custom_call.1} parent=5 // pred_check_branch
        %445 = sbr.rel (%p442) target = $region12
      $region11: #{tpu_custom_call.1} parent=5 // pred_region
        %s446 = ssub.s32 %s24, 1
        // Predicated region
        $region13: #{tpu_custom_call.1} parent=11 // pred_check
          %p447 = pneg %p62
        $region14: #{tpu_custom_call.1} parent=11 // pred_check_branch
          %449 = sbr.rel (%p447) target = $region16
        $region15: #{tpu_custom_call.1} parent=11 // pred_region
          %s451 = ssub.s32 128, 128
          %452 = vsyncadd [#allocation4], %s451
          %s453 = smul.addr %s33, 128
          %s454 = scalar_lea.hbm %s0, %s453
          %s456 = sshll.u32 [#allocation3], 4
          %s457 = int_to_ptr.vmem [resolvable:$true] %s456
          %459 = dma.hbm_to_vmem [thread:$0]  %s454, 128, %s457, [#allocation4]
        $region16: #{tpu_custom_call.1} parent=11 // pred_fallthru
          _
        // Predicated region
        $region17: #{tpu_custom_call.1} parent=11 // pred_check
          %p460 = pneg %p83
        $region18: #{tpu_custom_call.1} parent=11 // pred_check_branch
          %462 = sbr.rel (%p460) target = $region20
        $region19: #{tpu_custom_call.1} parent=11 // pred_region
          %s464 = ssub.s32 2048, 2048
          %465 = vsyncadd [#allocation7], %s464
          %s466 = sshll.u32 [#allocation6], 4
          %s467 = int_to_ptr.vmem [resolvable:$true] %s466
          %472 = dma.hbm_to_vmem [thread:$0]  %s1, 2048, %s467, [#allocation7], 128, 128, 8
        $region20: #{tpu_custom_call.1} parent=11 // pred_fallthru
          _
        // Predicated region
        $region21: #{tpu_custom_call.1} parent=11 // pred_check
          %p473 = pneg %p104
        $region22: #{tpu_custom_call.1} parent=11 // pred_check_branch
          %475 = sbr.rel (%p473) target = $region24
        $region23: #{tpu_custom_call.1} parent=11 // pred_region
          _
        $region24: #{tpu_custom_call.1} parent=11 // pred_fallthru
          _
        // Predicated region
        $region25: #{tpu_custom_call.1} parent=11 // pred_check
          %p476 = pneg %p385
        $region26: #{tpu_custom_call.1} parent=11 // pred_check_branch
          %478 = sbr.rel (%p476) target = $region28
        $region27: #{tpu_custom_call.1} parent=11 // pred_region
          %s480 = ssub.s32 2048, 2048
          %481 = vsyncadd [#allocation7], %s480
          %s482 = sshll.u32 [#allocation11], 4
          %s483 = int_to_ptr.vmem [resolvable:$true] %s482
          %488 = dma.hbm_to_vmem [thread:$0]  %s13, 2048, %s483, [#allocation7], 128, 128, 8
        $region28: #{tpu_custom_call.1} parent=11 // pred_fallthru
          _
        // Predicated region
        $region29: #{tpu_custom_call.1} parent=11 // pred_check
          %p489 = pneg %p406
        $region30: #{tpu_custom_call.1} parent=11 // pred_check_branch
          %491 = sbr.rel (%p489) target = $region32
        $region31: #{tpu_custom_call.1} parent=11 // pred_region
          _
        $region32: #{tpu_custom_call.1} parent=11 // pred_fallthru
          _
      $region12: #{tpu_custom_call.1} parent=5 // pred_fallthru
        _
      %p492 = scmp.lt.s32.totalorder %s24, 2
      // Predicated region
      $region33: #{tpu_custom_call.1} parent=5 // pred_check
        %p493 = pneg %p492
      $region34: #{tpu_custom_call.1} parent=5 // pred_check_branch
        %495 = sbr.rel (%p493) target = $region36
      $region35: #{tpu_custom_call.1} parent=5 // pred_region
        // Predicated region
        $region37: #{tpu_custom_call.1} parent=35 // pred_check
          %p496 = pneg %p124
        $region38: #{tpu_custom_call.1} parent=35 // pred_check_branch
          %498 = sbr.rel (%p496) target = $region40
        $region39: #{tpu_custom_call.1} parent=35 // pred_region
          %s499 = sand.u32 %s24, 1
          %s500 = scalar_lea.sflag [#allocation4], %s499
          %s501 = sand.u32 %s114, 1
          %s502 = smul.addr %s501, 128
          %s503 = scalar_lea.vmem [#allocation8], %s502
          %s505 = ssub.s32 2048, 2048
          %506 = vsyncadd %s500, %s505
          %s507 = smul.addr %s32, 16
          %s508 = smul.addr %s507, 128
          %s509 = scalar_lea.hbm %s3, %s508
          %s510 = sshll.u32 %s503, 4
          %s511 = int_to_ptr.vmem [resolvable:$true] %s510
          %516 = dma.hbm_to_vmem [thread:$0]  %s509, 2048, %s511, %s500, 128, 128, 8
        $region40: #{tpu_custom_call.1} parent=35 // pred_fallthru
          _
        // Predicated region
        $region41: #{tpu_custom_call.1} parent=35 // pred_check
          %p517 = pneg %p150
        $region42: #{tpu_custom_call.1} parent=35 // pred_check_branch
          %519 = sbr.rel (%p517) target = $region44
        $region43: #{tpu_custom_call.1} parent=35 // pred_region
          %p520 = scmp.lt.s32.totalorder %s32, 1
          %s521 = scalar_select %p520, %s32, 1
          %s522 = scalar_lea.vmem %s4, %s521
        $region44: #{tpu_custom_call.1} parent=35 // pred_fallthru
          _
        // Predicated region
        $region45: #{tpu_custom_call.1} parent=35 // pred_check
          %p523 = pneg %p176
        $region46: #{tpu_custom_call.1} parent=35 // pred_check_branch
          %525 = sbr.rel (%p523) target = $region48
        $region47: #{tpu_custom_call.1} parent=35 // pred_region
          %s526 = sand.u32 %s24, 1
          %s527 = scalar_lea.sflag [#allocation4], %s526
          %s528 = sand.u32 %s166, 1
          %s529 = smul.addr %s528, 128
          %s530 = scalar_lea.vmem [#allocation9], %s529
          %s532 = ssub.s32 2048, 2048
          %533 = vsyncadd %s527, %s532
          %s534 = smul.addr %s32, 16
          %s535 = smul.addr %s534, 128
          %s536 = scalar_lea.hbm %s5, %s535
          %s537 = sshll.u32 %s530, 4
          %s538 = int_to_ptr.vmem [resolvable:$true] %s537
          %543 = dma.hbm_to_vmem [thread:$0]  %s536, 2048, %s538, %s527, 128, 128, 8
        $region48: #{tpu_custom_call.1} parent=35 // pred_fallthru
          _
        // Predicated region
        $region49: #{tpu_custom_call.1} parent=35 // pred_check
          %p544 = pneg %p202
        $region50: #{tpu_custom_call.1} parent=35 // pred_check_branch
          %546 = sbr.rel (%p544) target = $region52
        $region51: #{tpu_custom_call.1} parent=35 // pred_region
          %p547 = scmp.lt.s32.totalorder %s32, 1
          %s548 = scalar_select %p547, %s32, 1
          %s549 = scalar_lea.vmem %s6, %s548
        $region52: #{tpu_custom_call.1} parent=35 // pred_fallthru
          _
        // Predicated region
        $region53: #{tpu_custom_call.1} parent=35 // pred_check
          %p550 = pneg %p228
        $region54: #{tpu_custom_call.1} parent=35 // pred_check_branch
          %552 = sbr.rel (%p550) target = $region56
        $region55: #{tpu_custom_call.1} parent=35 // pred_region
          %s553 = sand.u32 %s24, 1
          %s554 = scalar_lea.sflag [#allocation4], %s553
          %s555 = sand.u32 %s218, 1
          %s556 = smul.addr %s555, 128
          %s557 = scalar_lea.vmem [#allocation10], %s556
          %s559 = ssub.s32 2048, 2048
          %560 = vsyncadd %s554, %s559
          %s561 = smul.addr %s32, 16
          %s562 = smul.addr %s561, 128
          %s563 = scalar_lea.hbm %s7, %s562
          %s564 = sshll.u32 %s557, 4
          %s565 = int_to_ptr.vmem [resolvable:$true] %s564
          %570 = dma.hbm_to_vmem [thread:$0]  %s563, 2048, %s565, %s554, 128, 128, 8
        $region56: #{tpu_custom_call.1} parent=35 // pred_fallthru
          _
        // Predicated region
        $region57: #{tpu_custom_call.1} parent=35 // pred_check
          %p571 = pneg %p254
        $region58: #{tpu_custom_call.1} parent=35 // pred_check_branch
          %573 = sbr.rel (%p571) target = $region60
        $region59: #{tpu_custom_call.1} parent=35 // pred_region
          %p574 = scmp.lt.s32.totalorder %s32, 1
          %s575 = scalar_select %p574, %s32, 1
          %s576 = scalar_lea.vmem %s8, %s575
        $region60: #{tpu_custom_call.1} parent=35 // pred_fallthru
          _
        // Predicated region
        $region61: #{tpu_custom_call.1} parent=35 // pred_check
          %p577 = pneg %p280
        $region62: #{tpu_custom_call.1} parent=35 // pred_check_branch
          %579 = sbr.rel (%p577) target = $region64
        $region63: #{tpu_custom_call.1} parent=35 // pred_region
          %p580 = scmp.lt.s32.totalorder %s32, 1
          %s581 = scalar_select %p580, %s32, 1
          %s582 = scalar_lea.vmem %s9, %s581
        $region64: #{tpu_custom_call.1} parent=35 // pred_fallthru
          _
        // Predicated region
        $region65: #{tpu_custom_call.1} parent=35 // pred_check
          %p583 = pneg %p306
        $region66: #{tpu_custom_call.1} parent=35 // pred_check_branch
          %585 = sbr.rel (%p583) target = $region68
        $region67: #{tpu_custom_call.1} parent=35 // pred_region
          %p586 = scmp.lt.s32.totalorder %s32, 1
          %s587 = scalar_select %p586, %s32, 1
          %s588 = scalar_lea.vmem %s10, %s587
        $region68: #{tpu_custom_call.1} parent=35 // pred_fallthru
          _
        // Predicated region
        $region69: #{tpu_custom_call.1} parent=35 // pred_check
          %p589 = pneg %p332
        $region70: #{tpu_custom_call.1} parent=35 // pred_check_branch
          %591 = sbr.rel (%p589) target = $region72
        $region71: #{tpu_custom_call.1} parent=35 // pred_region
          %p592 = scmp.lt.s32.totalorder %s32, 1
          %s593 = scalar_select %p592, %s32, 1
          %s594 = scalar_lea.vmem %s11, %s593
        $region72: #{tpu_custom_call.1} parent=35 // pred_fallthru
          _
        // Predicated region
        $region73: #{tpu_custom_call.1} parent=35 // pred_check
          %p595 = pneg %p358
        $region74: #{tpu_custom_call.1} parent=35 // pred_check_branch
          %597 = sbr.rel (%p595) target = $region76
        $region75: #{tpu_custom_call.1} parent=35 // pred_region
          %p598 = scmp.lt.s32.totalorder %s32, 1
          %s599 = scalar_select %p598, %s32, 1
          %s600 = scalar_lea.vmem %s12, %s599
        $region76: #{tpu_custom_call.1} parent=35 // pred_fallthru
          _
      $region36: #{tpu_custom_call.1} parent=5 // pred_fallthru
        _
      %p601 = scmp.le.s32.totalorder 1, %s24
      %p602 = scmp.lt.s32.totalorder %s24, 3
      %p603 = pnand %p601, %p602
      %p604 = pneg %p603
      // Predicated region
      $region77: #{tpu_custom_call.1} parent=5 // pred_check
        _
      $region78: #{tpu_custom_call.1} parent=5 // pred_check_branch
        %606 = sbr.rel (%p603) target = $region80
      $region79: #{tpu_custom_call.1} parent=5 // pred_region
        %s607 = ssub.s32 %s24, 1
        // Predicated region
        $region81: #{tpu_custom_call.1} parent=79 // pred_check
          %p608 = pneg %p62
        $region82: #{tpu_custom_call.1} parent=79 // pred_check_branch
          %610 = sbr.rel (%p608) target = $region84
        $region83: #{tpu_custom_call.1} parent=79 // pred_region
          %611 = dma.done [#allocation4], 128
        $region84: #{tpu_custom_call.1} parent=79 // pred_fallthru
          _
        // Predicated region
        $region85: #{tpu_custom_call.1} parent=79 // pred_check
          %p612 = pneg %p83
        $region86: #{tpu_custom_call.1} parent=79 // pred_check_branch
          %614 = sbr.rel (%p612) target = $region88
        $region87: #{tpu_custom_call.1} parent=79 // pred_region
          %615 = dma.done [#allocation7], 2048
        $region88: #{tpu_custom_call.1} parent=79 // pred_fallthru
          _
        %s616 = sand.u32 %s29, 1
        %s617 = scalar_lea.sflag [#allocation4], %s616
        %s618 = sand.u32 %s117, 1
        %s619 = smul.addr %s618, 128
        %s620 = scalar_lea.vmem [#allocation8], %s619
        // Predicated region
        $region89: #{tpu_custom_call.1} parent=79 // pred_check
          %p621 = pneg %p130
        $region90: #{tpu_custom_call.1} parent=79 // pred_check_branch
          %623 = sbr.rel (%p621) target = $region92
        $region91: #{tpu_custom_call.1} parent=79 // pred_region
          %624 = dma.done %s617, 2048
        $region92: #{tpu_custom_call.1} parent=79 // pred_fallthru
          _
        %s625 = sand.u32 %s29, 1
        %s626 = scalar_lea.sflag [#allocation4], %s625
        %s627 = sand.u32 %s169, 1
        %s628 = smul.addr %s627, 128
        %s629 = scalar_lea.vmem [#allocation9], %s628
        // Predicated region
        $region93: #{tpu_custom_call.1} parent=79 // pred_check
          %p630 = pneg %p182
        $region94: #{tpu_custom_call.1} parent=79 // pred_check_branch
          %632 = sbr.rel (%p630) target = $region96
        $region95: #{tpu_custom_call.1} parent=79 // pred_region
          %633 = dma.done %s626, 2048
        $region96: #{tpu_custom_call.1} parent=79 // pred_fallthru
          _
        %s634 = sand.u32 %s29, 1
        %s635 = scalar_lea.sflag [#allocation4], %s634
        %s636 = sand.u32 %s221, 1
        %s637 = smul.addr %s636, 128
        %s638 = scalar_lea.vmem [#allocation10], %s637
        // Predicated region
        $region97: #{tpu_custom_call.1} parent=79 // pred_check
          %p639 = pneg %p234
        $region98: #{tpu_custom_call.1} parent=79 // pred_check_branch
          %641 = sbr.rel (%p639) target = $region100
        $region99: #{tpu_custom_call.1} parent=79 // pred_region
          %642 = dma.done %s635, 2048
        $region100: #{tpu_custom_call.1} parent=79 // pred_fallthru
          _
        // Predicated region
        $region101: #{tpu_custom_call.1} parent=79 // pred_check
          %p643 = pneg %p385
        $region102: #{tpu_custom_call.1} parent=79 // pred_check_branch
          %645 = sbr.rel (%p643) target = $region104
        $region103: #{tpu_custom_call.1} parent=79 // pred_region
          %646 = dma.done [#allocation7], 2048
        $region104: #{tpu_custom_call.1} parent=79 // pred_fallthru
          _
        %p647 = pneg %p62
        %p648 = pneg %p59
        %p649 = pneg %p83
        %p650 = pneg %p80
        %p651 = pneg %p104
        %p652 = pneg %p101
        %s653 = sand.u32 %s29, 1
        %s654 = scalar_lea.sflag [#allocation4], %s653
        %s655 = sand.u32 %s117, 1
        %s656 = smul.addr %s655, 128
        %s657 = scalar_lea.vmem [#allocation8], %s656
        %p658 = pneg %p130
        %p659 = pneg %p127
        %p660 = scmp.lt.s32.totalorder %s34, 1
        %s661 = scalar_select %p660, %s34, 1
        %s662 = scalar_lea.vmem %s4, %s661
        %p663 = pneg %p156
        %p664 = pneg %p153
        %s665 = sand.u32 %s29, 1
        %s666 = scalar_lea.sflag [#allocation4], %s665
        %s667 = sand.u32 %s169, 1
        %s668 = smul.addr %s667, 128
        %s669 = scalar_lea.vmem [#allocation9], %s668
        %p670 = pneg %p182
        %p671 = pneg %p179
        %p672 = scmp.lt.s32.totalorder %s34, 1
        %s673 = scalar_select %p672, %s34, 1
        %s674 = scalar_lea.vmem %s6, %s673
        %p675 = pneg %p208
        %p676 = pneg %p205
        %s677 = sand.u32 %s29, 1
        %s678 = scalar_lea.sflag [#allocation4], %s677
        %s679 = sand.u32 %s221, 1
        %s680 = smul.addr %s679, 128
        %s681 = scalar_lea.vmem [#allocation10], %s680
        %p682 = pneg %p234
        %p683 = pneg %p231
        %p684 = scmp.lt.s32.totalorder %s34, 1
        %s685 = scalar_select %p684, %s34, 1
        %s686 = scalar_lea.vmem %s8, %s685
        %p687 = pneg %p260
        %p688 = pneg %p257
        %p689 = scmp.lt.s32.totalorder %s34, 1
        %s690 = scalar_select %p689, %s34, 1
        %s691 = scalar_lea.vmem %s9, %s690
        %p692 = pneg %p286
        %p693 = pneg %p283
        %p694 = scmp.lt.s32.totalorder %s34, 1
        %s695 = scalar_select %p694, %s34, 1
        %s696 = scalar_lea.vmem %s10, %s695
        %p697 = pneg %p312
        %p698 = pneg %p309
        %p699 = scmp.lt.s32.totalorder %s34, 1
        %s700 = scalar_select %p699, %s34, 1
        %s701 = scalar_lea.vmem %s11, %s700
        %p702 = pneg %p338
        %p703 = pneg %p335
        %p704 = scmp.lt.s32.totalorder %s34, 1
        %s705 = scalar_select %p704, %s34, 1
        %s706 = scalar_lea.vmem %s12, %s705
        %p707 = pneg %p364
        %p708 = pneg %p361
        %p709 = pneg %p385
        %p710 = pneg %p382
        %p711 = pneg %p406
        %p712 = pneg %p403
        %p713 = pneg %p432
        %p714 = pneg %p429
        %p715 = scmp.lt.s32.totalorder %s34, 1
        %s716 = scalar_select %p715, %s34, 1
        %s717 = scalar_lea.vmem %s4, %s716
        %p718 = scmp.lt.s32.totalorder %s34, 1
        %s719 = scalar_select %p718, %s34, 1
        %s720 = scalar_lea.vmem %s6, %s719
        %p721 = scmp.lt.s32.totalorder %s34, 1
        %s722 = scalar_select %p721, %s34, 1
        %s723 = scalar_lea.vmem %s8, %s722
        %p724 = scmp.lt.s32.totalorder %s34, 1
        %s725 = scalar_select %p724, %s34, 1
        %s726 = scalar_lea.vmem %s9, %s725
        %p727 = scmp.lt.s32.totalorder %s34, 1
        %s728 = scalar_select %p727, %s34, 1
        %s729 = scalar_lea.vmem %s10, %s728
        %p730 = scmp.lt.s32.totalorder %s34, 1
        %s731 = scalar_select %p730, %s34, 1
        %s732 = scalar_lea.vmem %s11, %s731
        %p733 = scmp.lt.s32.totalorder %s34, 1
        %s734 = scalar_select %p733, %s34, 1
        %s735 = scalar_lea.vmem %s12, %s734
        %v736 = vlaneseq
        %v737 = vand.u32 %v736, 127
        %vm738 = vcmp.lt.s32.totalorder %v737, 64
        %v739 = vsel %vm738, 1, 0
        %v740 = vcvt.s32.f32 %v739
        %p741 = scmp.eq.s32.totalorder %s34, 0
        // Predicated region
        $region105: #{tpu_custom_call.1} parent=79 // pred_check
          %p742 = pneg %p741
        $region106: #{tpu_custom_call.1} parent=79 // pred_check_branch
          %744 = sbr.rel (%p742) target = $region108
        $region107: #{tpu_custom_call.1} parent=79 // pred_region
          %v745 = vld [vmem:[#allocation3] sm:$0xff]
          %v746 = vld [vmem:[#allocation6] sm:$0xff]
          %v747 = vld [vmem:[#allocation6 + $0x8] sm:$0xff]
          %v748 = vld [vmem:[#allocation6 + $0x10] sm:$0xff]
          %v749 = vld [vmem:[#allocation6 + $0x18] sm:$0xff]
          %v750 = vld [vmem:[#allocation6 + $0x20] sm:$0xff]
          %v751 = vld [vmem:[#allocation6 + $0x28] sm:$0xff]
          %v752 = vld [vmem:[#allocation6 + $0x30] sm:$0xff]
          %v753 = vld [vmem:[#allocation6 + $0x38] sm:$0xff]
          %v754 = vld [vmem:[#allocation6 + $0x40] sm:$0xff]
          %v755 = vld [vmem:[#allocation6 + $0x48] sm:$0xff]
          %v756 = vld [vmem:[#allocation6 + $0x50] sm:$0xff]
          %v757 = vld [vmem:[#allocation6 + $0x58] sm:$0xff]
          %v758 = vld [vmem:[#allocation6 + $0x60] sm:$0xff]
          %v759 = vld [vmem:[#allocation6 + $0x68] sm:$0xff]
          %v760 = vld [vmem:[#allocation6 + $0x70] sm:$0xff]
          %v761 = vld [vmem:[#allocation6 + $0x78] sm:$0xff]
          %v762 = vld [vmem:[%s2] sm:$0x1]
          %v764 = vlaneseq
          %v765 = vshrl.u32 %v764, 7
          %v766 = vsub.s32 0, %v765
          %v767 = vrot.slane %v762, %v766
          %769 = vmatprep.subr.mxu0 0.0
          %770 = vmatpush1.msra.mxu0 %v746
          %771 = vmatprep.subr.mxu0 0.0
          %772 = vmatpush1.msra.mxu0 %v747
          %773 = vmatprep.subr.mxu0 0.0
          %774 = vmatpush1.msra.mxu0 %v748
          %775 = vmatprep.subr.mxu0 0.0
          %776 = vmatpush1.msra.mxu0 %v749
          %777 = vmatprep.subr.mxu0 0.0
          %778 = vmatpush1.msra.mxu0 %v750
          %779 = vmatprep.subr.mxu0 0.0
          %780 = vmatpush1.msra.mxu0 %v751
          %781 = vmatprep.subr.mxu0 0.0
          %782 = vmatpush1.msra.mxu0 %v752
          %783 = vmatprep.subr.mxu0 0.0
          %784 = vmatpush1.msra.mxu0 %v753
          %785 = vmatprep.subr.mxu0 0.0
          %786 = vmatpush1.msra.mxu0 %v754
          %787 = vmatprep.subr.mxu0 0.0
          %788 = vmatpush1.msra.mxu0 %v755
          %789 = vmatprep.subr.mxu0 0.0
          %790 = vmatpush1.msra.mxu0 %v756
          %791 = vmatprep.subr.mxu0 0.0
          %792 = vmatpush1.msra.mxu0 %v757
          %793 = vmatprep.subr.mxu0 0.0
          %794 = vmatpush1.msra.mxu0 %v758
          %795 = vmatprep.subr.mxu0 0.0
          %796 = vmatpush1.msra.mxu0 %v759
          %797 = vmatprep.subr.mxu0 0.0
          %798 = vmatpush1.msra.mxu0 %v760
          %799 = vmatprep.subr.mxu0 0.0
          %800 = vmatpush1.msra.mxu0 %v761
          %801 = vmatprep.subr.mxu0 0.0
          %802 = vmatpush1.msra.mxu0 0.0
          %803 = vmatprep.subr.mxu0 0.0
          %804 = vmatpush1.msra.mxu0 0.0
          %805 = vmatprep.subr.mxu0 0.0
          %806 = vmatpush1.msra.mxu0 0.0
          %807 = vmatprep.subr.mxu0 0.0
          %808 = vmatpush1.msra.mxu0 0.0
          %809 = vmatprep.subr.mxu0 0.0
          %810 = vmatpush1.msra.mxu0 0.0
          %811 = vmatprep.subr.mxu0 0.0
          %812 = vmatpush1.msra.mxu0 0.0
          %813 = vmatprep.subr.mxu0 0.0
          %814 = vmatpush1.msra.mxu0 0.0
          %815 = vmatprep.subr.mxu0 0.0
          %816 = vmatpush1.msra.mxu0 0.0
          %817 = vmatprep.subr.mxu0 0.0
          %818 = vmatpush1.msra.mxu0 0.0
          %819 = vmatprep.subr.mxu0 0.0
          %820 = vmatpush1.msra.mxu0 0.0
          %821 = vmatprep.subr.mxu0 0.0
          %822 = vmatpush1.msra.mxu0 0.0
          %823 = vmatprep.subr.mxu0 0.0
          %824 = vmatpush1.msra.mxu0 0.0
          %825 = vmatprep.subr.mxu0 0.0
          %826 = vmatpush1.msra.mxu0 0.0
          %827 = vmatprep.subr.mxu0 0.0
          %828 = vmatpush1.msra.mxu0 0.0
          %829 = vmatprep.subr.mxu0 0.0
          %830 = vmatpush1.msra.mxu0 0.0
          %831 = vmatprep.subr.mxu0 0.0
          %832 = vmatpush1.msra.mxu0 0.0
          %833 = vmatprep.mubr.f32.mxu0 0.0
          %834 = vmatmul.mubr.f32.gmra.mrb[0].mxu0 %v745
          %v835 = vpop.f32.mrb[0].mxu0
          %v836 = vadd.f32 %v767, %v835
          %v837 = vpop.f32.mrb[0].mxu0
          %838 = vdwg.mxu0
          %839 = vst [vmem:[#allocation2] sm:$0xff] %v836
        $region108: #{tpu_custom_call.1} parent=79 // pred_fallthru
          _
        %v840 = vld [vmem:[#allocation2] sm:$0xff]
        %v841 = vld [vmem:[%s620] sm:$0xff]
        %v842 = vld [vmem:[%s620 + $0x8] sm:$0xff]
        %v843 = vld [vmem:[%s620 + $0x10] sm:$0xff]
        %v844 = vld [vmem:[%s620 + $0x18] sm:$0xff]
        %v845 = vld [vmem:[%s620 + $0x20] sm:$0xff]
        %v846 = vld [vmem:[%s620 + $0x28] sm:$0xff]
        %v847 = vld [vmem:[%s620 + $0x30] sm:$0xff]
        %v848 = vld [vmem:[%s620 + $0x38] sm:$0xff]
        %v849 = vld [vmem:[%s620 + $0x40] sm:$0xff]
        %v850 = vld [vmem:[%s620 + $0x48] sm:$0xff]
        %v851 = vld [vmem:[%s620 + $0x50] sm:$0xff]
        %v852 = vld [vmem:[%s620 + $0x58] sm:$0xff]
        %v853 = vld [vmem:[%s620 + $0x60] sm:$0xff]
        %v854 = vld [vmem:[%s620 + $0x68] sm:$0xff]
        %v855 = vld [vmem:[%s620 + $0x70] sm:$0xff]
        %v856 = vld [vmem:[%s620 + $0x78] sm:$0xff]
        %v857 = vld [vmem:[%s717] sm:$0x1]
        %v859 = vlaneseq
        %v860 = vshrl.u32 %v859, 7
        %v861 = vsub.s32 0, %v860
        %v862 = vrot.slane %v857, %v861
        %864 = vmatprep.subr.mxu0 0.0
        %865 = vmatpush1.msra.mxu0 %v841
        %866 = vmatprep.subr.mxu0 0.0
        %867 = vmatpush1.msra.mxu0 %v842
        %868 = vmatprep.subr.mxu0 0.0
        %869 = vmatpush1.msra.mxu0 %v843
        %870 = vmatprep.subr.mxu0 0.0
        %871 = vmatpush1.msra.mxu0 %v844
        %872 = vmatprep.subr.mxu0 0.0
        %873 = vmatpush1.msra.mxu0 %v845
        %874 = vmatprep.subr.mxu0 0.0
        %875 = vmatpush1.msra.mxu0 %v846
        %876 = vmatprep.subr.mxu0 0.0
        %877 = vmatpush1.msra.mxu0 %v847
        %878 = vmatprep.subr.mxu0 0.0
        %879 = vmatpush1.msra.mxu0 %v848
        %880 = vmatprep.subr.mxu0 0.0
        %881 = vmatpush1.msra.mxu0 %v849
        %882 = vmatprep.subr.mxu0 0.0
        %883 = vmatpush1.msra.mxu0 %v850
        %884 = vmatprep.subr.mxu0 0.0
        %885 = vmatpush1.msra.mxu0 %v851
        %886 = vmatprep.subr.mxu0 0.0
        %887 = vmatpush1.msra.mxu0 %v852
        %888 = vmatprep.subr.mxu0 0.0
        %889 = vmatpush1.msra.mxu0 %v853
        %890 = vmatprep.subr.mxu0 0.0
        %891 = vmatpush1.msra.mxu0 %v854
        %892 = vmatprep.subr.mxu0 0.0
        %893 = vmatpush1.msra.mxu0 %v855
        %894 = vmatprep.subr.mxu0 0.0
        %895 = vmatpush1.msra.mxu0 %v856
        %896 = vmatprep.subr.mxu0 0.0
        %897 = vmatpush1.msra.mxu0 0.0
        %898 = vmatprep.subr.mxu0 0.0
        %899 = vmatpush1.msra.mxu0 0.0
        %900 = vmatprep.subr.mxu0 0.0
        %901 = vmatpush1.msra.mxu0 0.0
        %902 = vmatprep.subr.mxu0 0.0
        %903 = vmatpush1.msra.mxu0 0.0
        %904 = vmatprep.subr.mxu0 0.0
        %905 = vmatpush1.msra.mxu0 0.0
        %906 = vmatprep.subr.mxu0 0.0
        %907 = vmatpush1.msra.mxu0 0.0
        %908 = vmatprep.subr.mxu0 0.0
        %909 = vmatpush1.msra.mxu0 0.0
        %910 = vmatprep.subr.mxu0 0.0
        %911 = vmatpush1.msra.mxu0 0.0
        %912 = vmatprep.subr.mxu0 0.0
        %913 = vmatpush1.msra.mxu0 0.0
        %914 = vmatprep.subr.mxu0 0.0
        %915 = vmatpush1.msra.mxu0 0.0
        %916 = vmatprep.subr.mxu0 0.0
        %917 = vmatpush1.msra.mxu0 0.0
        %918 = vmatprep.subr.mxu0 0.0
        %919 = vmatpush1.msra.mxu0 0.0
        %920 = vmatprep.subr.mxu0 0.0
        %921 = vmatpush1.msra.mxu0 0.0
        %922 = vmatprep.subr.mxu0 0.0
        %923 = vmatpush1.msra.mxu0 0.0
        %924 = vmatprep.subr.mxu0 0.0
        %925 = vmatpush1.msra.mxu0 0.0
        %926 = vmatprep.subr.mxu0 0.0
        %927 = vmatpush1.msra.mxu0 0.0
        %928 = vmatprep.mubr.f32.mxu0 0.0
        %929 = vmatmul.mubr.f32.gmra.mrb[0].mxu0 %v840
        %v930 = vpop.f32.mrb[0].mxu0
        %v931 = vadd.f32 %v862, %v930
        %v932 = vpop.f32.mrb[0].mxu0
        %933 = vdwg.mxu0
        %v934 = vadd.f32 %v840, %v931
        %v935 = vld [vmem:[%s726] sm:$0x1]
        %v936 = vld [vmem:[%s729] sm:$0x1]
        %937 = vadd.xlane.f32.xlu0 %v934
        %v938 = vpop.xlane.xlu0 %937
        %v939 = vmul.f32 %v938, 0.015625
        %v940 = vsub.f32 %v934, %v939
        %v941 = vmul.f32 %v940, %v740
        %v942 = vmul.f32 %v941, %v941
        %943 = vadd.xlane.f32.xlu0 %v942
        %v944 = vpop.xlane.xlu0 %943
        %v945 = vmul.f32 %v944, 0.015625
        %v946 = vadd.f32 %v945, 1e-05
        %v947 = vrsqrt.pop %v946
        %v948 = vmul.f32 %v941, %v947
        %v950 = vlaneseq
        %v951 = vshrl.u32 %v950, 7
        %v952 = vsub.s32 0, %v951
        %v953 = vrot.slane %v935, %v952
        %v955 = vmul.f32 %v948, %v953
        %v957 = vlaneseq
        %v958 = vshrl.u32 %v957, 7
        %v959 = vsub.s32 0, %v958
        %v960 = vrot.slane %v936, %v959
        %v962 = vadd.f32 %v955, %v960
        %v963 = vld [vmem:[%s629] sm:$0xff]
        %v964 = vld [vmem:[%s629 + $0x8] sm:$0xff]
        %v965 = vld [vmem:[%s629 + $0x10] sm:$0xff]
        %v966 = vld [vmem:[%s629 + $0x18] sm:$0xff]
        %v967 = vld [vmem:[%s629 + $0x20] sm:$0xff]
        %v968 = vld [vmem:[%s629 + $0x28] sm:$0xff]
        %v969 = vld [vmem:[%s629 + $0x30] sm:$0xff]
        %v970 = vld [vmem:[%s629 + $0x38] sm:$0xff]
        %v971 = vld [vmem:[%s629 + $0x40] sm:$0xff]
        %v972 = vld [vmem:[%s629 + $0x48] sm:$0xff]
        %v973 = vld [vmem:[%s629 + $0x50] sm:$0xff]
        %v974 = vld [vmem:[%s629 + $0x58] sm:$0xff]
        %v975 = vld [vmem:[%s629 + $0x60] sm:$0xff]
        %v976 = vld [vmem:[%s629 + $0x68] sm:$0xff]
        %v977 = vld [vmem:[%s629 + $0x70] sm:$0xff]
        %v978 = vld [vmem:[%s629 + $0x78] sm:$0xff]
        %v979 = vld [vmem:[%s720] sm:$0x1]
        %v981 = vlaneseq
        %v982 = vshrl.u32 %v981, 7
        %v983 = vsub.s32 0, %v982
        %v984 = vrot.slane %v979, %v983
        %986 = vmatprep.subr.mxu0 0.0
        %987 = vmatpush1.msra.mxu0 %v963
        %988 = vmatprep.subr.mxu0 0.0
        %989 = vmatpush1.msra.mxu0 %v964
        %990 = vmatprep.subr.mxu0 0.0
        %991 = vmatpush1.msra.mxu0 %v965
        %992 = vmatprep.subr.mxu0 0.0
        %993 = vmatpush1.msra.mxu0 %v966
        %994 = vmatprep.subr.mxu0 0.0
        %995 = vmatpush1.msra.mxu0 %v967
        %996 = vmatprep.subr.mxu0 0.0
        %997 = vmatpush1.msra.mxu0 %v968
        %998 = vmatprep.subr.mxu0 0.0
        %999 = vmatpush1.msra.mxu0 %v969
        %1000 = vmatprep.subr.mxu0 0.0
        %1001 = vmatpush1.msra.mxu0 %v970
        %1002 = vmatprep.subr.mxu0 0.0
        %1003 = vmatpush1.msra.mxu0 %v971
        %1004 = vmatprep.subr.mxu0 0.0
        %1005 = vmatpush1.msra.mxu0 %v972
        %1006 = vmatprep.subr.mxu0 0.0
        %1007 = vmatpush1.msra.mxu0 %v973
        %1008 = vmatprep.subr.mxu0 0.0
        %1009 = vmatpush1.msra.mxu0 %v974
        %1010 = vmatprep.subr.mxu0 0.0
        %1011 = vmatpush1.msra.mxu0 %v975
        %1012 = vmatprep.subr.mxu0 0.0
        %1013 = vmatpush1.msra.mxu0 %v976
        %1014 = vmatprep.subr.mxu0 0.0
        %1015 = vmatpush1.msra.mxu0 %v977
        %1016 = vmatprep.subr.mxu0 0.0
        %1017 = vmatpush1.msra.mxu0 %v978
        %1018 = vmatprep.subr.mxu0 0.0
        %1019 = vmatpush1.msra.mxu0 0.0
        %1020 = vmatprep.subr.mxu0 0.0
        %1021 = vmatpush1.msra.mxu0 0.0
        %1022 = vmatprep.subr.mxu0 0.0
        %1023 = vmatpush1.msra.mxu0 0.0
        %1024 = vmatprep.subr.mxu0 0.0
        %1025 = vmatpush1.msra.mxu0 0.0
        %1026 = vmatprep.subr.mxu0 0.0
        %1027 = vmatpush1.msra.mxu0 0.0
        %1028 = vmatprep.subr.mxu0 0.0
        %1029 = vmatpush1.msra.mxu0 0.0
        %1030 = vmatprep.subr.mxu0 0.0
        %1031 = vmatpush1.msra.mxu0 0.0
        %1032 = vmatprep.subr.mxu0 0.0
        %1033 = vmatpush1.msra.mxu0 0.0
        %1034 = vmatprep.subr.mxu0 0.0
        %1035 = vmatpush1.msra.mxu0 0.0
        %1036 = vmatprep.subr.mxu0 0.0
        %1037 = vmatpush1.msra.mxu0 0.0
        %1038 = vmatprep.subr.mxu0 0.0
        %1039 = vmatpush1.msra.mxu0 0.0
        %1040 = vmatprep.subr.mxu0 0.0
        %1041 = vmatpush1.msra.mxu0 0.0
        %1042 = vmatprep.subr.mxu0 0.0
        %1043 = vmatpush1.msra.mxu0 0.0
        %1044 = vmatprep.subr.mxu0 0.0
        %1045 = vmatpush1.msra.mxu0 0.0
        %1046 = vmatprep.subr.mxu0 0.0
        %1047 = vmatpush1.msra.mxu0 0.0
        %1048 = vmatprep.subr.mxu0 0.0
        %1049 = vmatpush1.msra.mxu0 0.0
        %1050 = vmatprep.mubr.f32.mxu0 0.0
        %1051 = vmatmul.mubr.f32.gmra.mrb[0].mxu0 %v962
        %v1052 = vpop.f32.mrb[0].mxu0
        %v1053 = vadd.f32 %v984, %v1052
        %v1054 = vpop.f32.mrb[0].mxu0
        %1055 = vdwg.mxu0
        %v1056 = vmax.f32 %v1053, 0.0
        %v1057 = vld [vmem:[%s638] sm:$0xff]
        %v1058 = vld [vmem:[%s638 + $0x8] sm:$0xff]
        %v1059 = vld [vmem:[%s638 + $0x10] sm:$0xff]
        %v1060 = vld [vmem:[%s638 + $0x18] sm:$0xff]
        %v1061 = vld [vmem:[%s638 + $0x20] sm:$0xff]
        %v1062 = vld [vmem:[%s638 + $0x28] sm:$0xff]
        %v1063 = vld [vmem:[%s638 + $0x30] sm:$0xff]
        %v1064 = vld [vmem:[%s638 + $0x38] sm:$0xff]
        %v1065 = vld [vmem:[%s638 + $0x40] sm:$0xff]
        %v1066 = vld [vmem:[%s638 + $0x48] sm:$0xff]
        %v1067 = vld [vmem:[%s638 + $0x50] sm:$0xff]
        %v1068 = vld [vmem:[%s638 + $0x58] sm:$0xff]
        %v1069 = vld [vmem:[%s638 + $0x60] sm:$0xff]
        %v1070 = vld [vmem:[%s638 + $0x68] sm:$0xff]
        %v1071 = vld [vmem:[%s638 + $0x70] sm:$0xff]
        %v1072 = vld [vmem:[%s638 + $0x78] sm:$0xff]
        %v1073 = vld [vmem:[%s723] sm:$0x1]
        %v1075 = vlaneseq
        %v1076 = vshrl.u32 %v1075, 7
        %v1077 = vsub.s32 0, %v1076
        %v1078 = vrot.slane %v1073, %v1077
        %1080 = vmatprep.subr.mxu0 0.0
        %1081 = vmatpush1.msra.mxu0 %v1057
        %1082 = vmatprep.subr.mxu0 0.0
        %1083 = vmatpush1.msra.mxu0 %v1058
        %1084 = vmatprep.subr.mxu0 0.0
        %1085 = vmatpush1.msra.mxu0 %v1059
        %1086 = vmatprep.subr.mxu0 0.0
        %1087 = vmatpush1.msra.mxu0 %v1060
        %1088 = vmatprep.subr.mxu0 0.0
        %1089 = vmatpush1.msra.mxu0 %v1061
        %1090 = vmatprep.subr.mxu0 0.0
        %1091 = vmatpush1.msra.mxu0 %v1062
        %1092 = vmatprep.subr.mxu0 0.0
        %1093 = vmatpush1.msra.mxu0 %v1063
        %1094 = vmatprep.subr.mxu0 0.0
        %1095 = vmatpush1.msra.mxu0 %v1064
        %1096 = vmatprep.subr.mxu0 0.0
        %1097 = vmatpush1.msra.mxu0 %v1065
        %1098 = vmatprep.subr.mxu0 0.0
        %1099 = vmatpush1.msra.mxu0 %v1066
        %1100 = vmatprep.subr.mxu0 0.0
        %1101 = vmatpush1.msra.mxu0 %v1067
        %1102 = vmatprep.subr.mxu0 0.0
        %1103 = vmatpush1.msra.mxu0 %v1068
        %1104 = vmatprep.subr.mxu0 0.0
        %1105 = vmatpush1.msra.mxu0 %v1069
        %1106 = vmatprep.subr.mxu0 0.0
        %1107 = vmatpush1.msra.mxu0 %v1070
        %1108 = vmatprep.subr.mxu0 0.0
        %1109 = vmatpush1.msra.mxu0 %v1071
        %1110 = vmatprep.subr.mxu0 0.0
        %1111 = vmatpush1.msra.mxu0 %v1072
        %1112 = vmatprep.subr.mxu0 0.0
        %1113 = vmatpush1.msra.mxu0 0.0
        %1114 = vmatprep.subr.mxu0 0.0
        %1115 = vmatpush1.msra.mxu0 0.0
        %1116 = vmatprep.subr.mxu0 0.0
        %1117 = vmatpush1.msra.mxu0 0.0
        %1118 = vmatprep.subr.mxu0 0.0
        %1119 = vmatpush1.msra.mxu0 0.0
        %1120 = vmatprep.subr.mxu0 0.0
        %1121 = vmatpush1.msra.mxu0 0.0
        %1122 = vmatprep.subr.mxu0 0.0
        %1123 = vmatpush1.msra.mxu0 0.0
        %1124 = vmatprep.subr.mxu0 0.0
        %1125 = vmatpush1.msra.mxu0 0.0
        %1126 = vmatprep.subr.mxu0 0.0
        %1127 = vmatpush1.msra.mxu0 0.0
        %1128 = vmatprep.subr.mxu0 0.0
        %1129 = vmatpush1.msra.mxu0 0.0
        %1130 = vmatprep.subr.mxu0 0.0
        %1131 = vmatpush1.msra.mxu0 0.0
        %1132 = vmatprep.subr.mxu0 0.0
        %1133 = vmatpush1.msra.mxu0 0.0
        %1134 = vmatprep.subr.mxu0 0.0
        %1135 = vmatpush1.msra.mxu0 0.0
        %1136 = vmatprep.subr.mxu0 0.0
        %1137 = vmatpush1.msra.mxu0 0.0
        %1138 = vmatprep.subr.mxu0 0.0
        %1139 = vmatpush1.msra.mxu0 0.0
        %1140 = vmatprep.subr.mxu0 0.0
        %1141 = vmatpush1.msra.mxu0 0.0
        %1142 = vmatprep.subr.mxu0 0.0
        %1143 = vmatpush1.msra.mxu0 0.0
        %1144 = vmatprep.mubr.f32.mxu0 0.0
        %1145 = vmatmul.mubr.f32.gmra.mrb[0].mxu0 %v1056
        %v1146 = vpop.f32.mrb[0].mxu0
        %v1147 = vadd.f32 %v1078, %v1146
        %v1148 = vpop.f32.mrb[0].mxu0
        %1149 = vdwg.mxu0
        %v1150 = vadd.f32 %v962, %v1147
        %v1151 = vld [vmem:[%s732] sm:$0x1]
        %v1152 = vld [vmem:[%s735] sm:$0x1]
        %1153 = vadd.xlane.f32.xlu0 %v1150
        %v1154 = vpop.xlane.xlu0 %1153
        %v1155 = vmul.f32 %v1154, 0.015625
        %v1156 = vsub.f32 %v1150, %v1155
        %v1157 = vmul.f32 %v1156, %v740
        %v1158 = vmul.f32 %v1157, %v1157
        %1159 = vadd.xlane.f32.xlu0 %v1158
        %v1160 = vpop.xlane.xlu0 %1159
        %v1161 = vmul.f32 %v1160, 0.015625
        %v1162 = vadd.f32 %v1161, 1e-05
        %v1163 = vrsqrt.pop %v1162
        %v1164 = vmul.f32 %v1157, %v1163
        %v1166 = vlaneseq
        %v1167 = vshrl.u32 %v1166, 7
        %v1168 = vsub.s32 0, %v1167
        %v1169 = vrot.slane %v1151, %v1168
        %v1171 = vmul.f32 %v1164, %v1169
        %v1173 = vlaneseq
        %v1174 = vshrl.u32 %v1173, 7
        %v1175 = vsub.s32 0, %v1174
        %v1176 = vrot.slane %v1152, %v1175
        %v1178 = vadd.f32 %v1171, %v1176
        %1179 = vst [vmem:[#allocation2] sm:$0xff] %v1178
        %p1180 = scmp.eq.s32.totalorder %s34, 1
        // Predicated region
        $region109: #{tpu_custom_call.1} parent=79 // pred_check
          %p1181 = pneg %p1180
        $region110: #{tpu_custom_call.1} parent=79 // pred_check_branch
          %1183 = sbr.rel (%p1181) target = $region112
        $region111: #{tpu_custom_call.1} parent=79 // pred_region
          %v1184 = vld [vmem:[#allocation11] sm:$0xff]
          %v1185 = vld [vmem:[#allocation11 + $0x8] sm:$0xff]
          %v1186 = vld [vmem:[#allocation11 + $0x10] sm:$0xff]
          %v1187 = vld [vmem:[#allocation11 + $0x18] sm:$0xff]
          %v1188 = vld [vmem:[#allocation11 + $0x20] sm:$0xff]
          %v1189 = vld [vmem:[#allocation11 + $0x28] sm:$0xff]
          %v1190 = vld [vmem:[#allocation11 + $0x30] sm:$0xff]
          %v1191 = vld [vmem:[#allocation11 + $0x38] sm:$0xff]
          %v1192 = vld [vmem:[#allocation11 + $0x40] sm:$0xff]
          %v1193 = vld [vmem:[#allocation11 + $0x48] sm:$0xff]
          %v1194 = vld [vmem:[#allocation11 + $0x50] sm:$0xff]
          %v1195 = vld [vmem:[#allocation11 + $0x58] sm:$0xff]
          %v1196 = vld [vmem:[#allocation11 + $0x60] sm:$0xff]
          %v1197 = vld [vmem:[#allocation11 + $0x68] sm:$0xff]
          %v1198 = vld [vmem:[#allocation11 + $0x70] sm:$0xff]
          %v1199 = vld [vmem:[#allocation11 + $0x78] sm:$0xff]
          %v1200 = vld [vmem:[%s14] sm:$0x1]
          %v1202 = vlaneseq
          %v1203 = vshrl.u32 %v1202, 7
          %v1204 = vsub.s32 0, %v1203
          %v1205 = vrot.slane %v1200, %v1204
          %1207 = vmatprep.subr.mxu0 0.0
          %1208 = vmatpush1.msra.mxu0 %v1184
          %1209 = vmatprep.subr.mxu0 0.0
          %1210 = vmatpush1.msra.mxu0 %v1185
          %1211 = vmatprep.subr.mxu0 0.0
          %1212 = vmatpush1.msra.mxu0 %v1186
          %1213 = vmatprep.subr.mxu0 0.0
          %1214 = vmatpush1.msra.mxu0 %v1187
          %1215 = vmatprep.subr.mxu0 0.0
          %1216 = vmatpush1.msra.mxu0 %v1188
          %1217 = vmatprep.subr.mxu0 0.0
          %1218 = vmatpush1.msra.mxu0 %v1189
          %1219 = vmatprep.subr.mxu0 0.0
          %1220 = vmatpush1.msra.mxu0 %v1190
          %1221 = vmatprep.subr.mxu0 0.0
          %1222 = vmatpush1.msra.mxu0 %v1191
          %1223 = vmatprep.subr.mxu0 0.0
          %1224 = vmatpush1.msra.mxu0 %v1192
          %1225 = vmatprep.subr.mxu0 0.0
          %1226 = vmatpush1.msra.mxu0 %v1193
          %1227 = vmatprep.subr.mxu0 0.0
          %1228 = vmatpush1.msra.mxu0 %v1194
          %1229 = vmatprep.subr.mxu0 0.0
          %1230 = vmatpush1.msra.mxu0 %v1195
          %1231 = vmatprep.subr.mxu0 0.0
          %1232 = vmatpush1.msra.mxu0 %v1196
          %1233 = vmatprep.subr.mxu0 0.0
          %1234 = vmatpush1.msra.mxu0 %v1197
          %1235 = vmatprep.subr.mxu0 0.0
          %1236 = vmatpush1.msra.mxu0 %v1198
          %1237 = vmatprep.subr.mxu0 0.0
          %1238 = vmatpush1.msra.mxu0 %v1199
          %1239 = vmatprep.subr.mxu0 0.0
          %1240 = vmatpush1.msra.mxu0 0.0
          %1241 = vmatprep.subr.mxu0 0.0
          %1242 = vmatpush1.msra.mxu0 0.0
          %1243 = vmatprep.subr.mxu0 0.0
          %1244 = vmatpush1.msra.mxu0 0.0
          %1245 = vmatprep.subr.mxu0 0.0
          %1246 = vmatpush1.msra.mxu0 0.0
          %1247 = vmatprep.subr.mxu0 0.0
          %1248 = vmatpush1.msra.mxu0 0.0
          %1249 = vmatprep.subr.mxu0 0.0
          %1250 = vmatpush1.msra.mxu0 0.0
          %1251 = vmatprep.subr.mxu0 0.0
          %1252 = vmatpush1.msra.mxu0 0.0
          %1253 = vmatprep.subr.mxu0 0.0
          %1254 = vmatpush1.msra.mxu0 0.0
          %1255 = vmatprep.subr.mxu0 0.0
          %1256 = vmatpush1.msra.mxu0 0.0
          %1257 = vmatprep.subr.mxu0 0.0
          %1258 = vmatpush1.msra.mxu0 0.0
          %1259 = vmatprep.subr.mxu0 0.0
          %1260 = vmatpush1.msra.mxu0 0.0
          %1261 = vmatprep.subr.mxu0 0.0
          %1262 = vmatpush1.msra.mxu0 0.0
          %1263 = vmatprep.subr.mxu0 0.0
          %1264 = vmatpush1.msra.mxu0 0.0
          %1265 = vmatprep.subr.mxu0 0.0
          %1266 = vmatpush1.msra.mxu0 0.0
          %1267 = vmatprep.subr.mxu0 0.0
          %1268 = vmatpush1.msra.mxu0 0.0
          %1269 = vmatprep.subr.mxu0 0.0
          %1270 = vmatpush1.msra.mxu0 0.0
          %1271 = vmatprep.mubr.f32.mxu0 0.0
          %1272 = vmatmul.mubr.f32.gmra.mrb[0].mxu0 %v1178
          %v1273 = vpop.f32.mrb[0].mxu0
          %v1274 = vadd.f32 %v1205, %v1273
          %v1275 = vpop.f32.mrb[0].mxu0
          %1276 = vdwg.mxu0
          %1277 = vst [vmem:[#allocation12] sm:$0xff] %v1274
        $region112: #{tpu_custom_call.1} parent=79 // pred_fallthru
          _
        // Predicated region
        $region113: #{tpu_custom_call.1} parent=79 // pred_check
          %p1278 = pneg %p429
        $region114: #{tpu_custom_call.1} parent=79 // pred_check_branch
          %1280 = sbr.rel (%p1278) target = $region116
        $region115: #{tpu_custom_call.1} parent=79 // pred_region
          %s1282 = ssub.s32 128, 128
          %1283 = vsyncadd [#allocation5], %s1282
          %s1284 = smul.addr %s33, 128
          %s1285 = scalar_lea.hbm %s15, %s1284
          %s1287 = sshll.u32 [#allocation12], 4
          %s1288 = int_to_ptr.vmem [resolvable:$true] %s1287
          %1290 = dma.vmem_to_hbm [thread:$0]  %s1288, 128, %s1285, [#allocation5]
        $region116: #{tpu_custom_call.1} parent=79 // pred_fallthru
          _
        // Predicated region
        $region117: #{tpu_custom_call.1} parent=79 // pred_check
          %p1291 = pneg %p429
        $region118: #{tpu_custom_call.1} parent=79 // pred_check_branch
          %1293 = sbr.rel (%p1291) target = $region120
        $region119: #{tpu_custom_call.1} parent=79 // pred_region
          %1294 = dma.done [#allocation5], 128
        $region120: #{tpu_custom_call.1} parent=79 // pred_fallthru
          _
      $region80: #{tpu_custom_call.1} parent=5 // pred_fallthru
        _
      %p1295 = scmp.le.s32.totalorder 2, %s24
      // Predicated region
      $region121: #{tpu_custom_call.1} parent=5 // pred_check
        %p1296 = pneg %p1295
      $region122: #{tpu_custom_call.1} parent=5 // pred_check_branch
        %1298 = sbr.rel (%p1296) target = $region124
      $region123: #{tpu_custom_call.1} parent=5 // pred_region
        %s1299 = ssub.s32 %s24, 2
      $region124: #{tpu_custom_call.1} parent=5 // pred_fallthru
        _
    $region6: #{tpu_custom_call.1} parent=1 // loop_footer
      %s28 = sadd.s32 1, %s24
    $region7: #{tpu_custom_call.1} parent=1 // loop_footer_branch
      %23 = sbr.rel target = $region3
    $region8: #{tpu_custom_call.1} parent=1 // loop_exit
      _
    %1300 = vsyncpa [#allocation4], 1
    %s1301 = scalar_lea.sflag [#allocation4], 1
    %1302 = vsyncpa %s1301, 1
    %1303 = vsyncpa [#allocation7], 1
    %1304 = vsyncpa [#allocation5], 1
    %s1305 = scalar_lea.sflag [#allocation5], 1
    %1306 = vsyncpa %s1305, 1

</llo_original>
